<compile_context>
chip_gen: v7x
topology: tpu7x:2x2x1
jax: 0.10.0
libtpu: 0.0.40
codegen_flags: <defaults>
</compile_context>

<pallas_src>
import functools

import jax
import jax.numpy as jnp
from jax.experimental import pallas as pl
from jax.experimental.pallas import tpu as pltpu


LN_EPS = 1e-5  # PyTorch nn.LayerNorm default
HIDDEN = 256


def _round_up(x: int, m: int) -> int:
    return ((x + m - 1) // m) * m


def make_actor_kernel(act_limit: float):
    def actor_kernel(obs_ref, w1_ref, b1_ref, g_ref, beta_ref,
                     w2_ref, b2_ref, w3_ref, b3_ref, out_ref):
        # ---- Linear(obs_dim, 256) + ReLU (bf16 operands, f32 accumulate) ----
        # obs arrives f32; the bf16 cast runs on the VPU, hidden under the MXU.
        x = obs_ref[...].astype(jnp.bfloat16)
        h = jnp.dot(x, w1_ref[...],
                    preferred_element_type=jnp.float32) + b1_ref[...]
        h = jnp.maximum(h, 0.0)

        # ---- LayerNorm(256): fused one-pass stats in f32 --------------------
        mu = jnp.mean(h, axis=-1, keepdims=True)
        ms = jnp.mean(h * h, axis=-1, keepdims=True)
        var = jnp.maximum(ms - mu * mu, 0.0)        # clamp cancellation error
        inv = jax.lax.rsqrt(var + LN_EPS)           # (tile_b, 1)
        scale = g_ref[...] * inv                    # gamma folded into the scale
        h = (h - mu) * scale + beta_ref[...]

        # ---- Linear(256, 256) + ReLU ----------------------------------------
        h2 = jnp.dot(h.astype(jnp.bfloat16), w2_ref[...],
                     preferred_element_type=jnp.float32) + b2_ref[...]
        h2 = jnp.maximum(h2, 0.0)

        # ---- Linear(256, act_pad) + Sigmoid, scaled by act_limit ------------
        z = jnp.dot(h2.astype(jnp.bfloat16), w3_ref[...],
                    preferred_element_type=jnp.float32) + b3_ref[...]
        out_ref[...] = (act_limit * jax.nn.sigmoid(z)).astype(out_ref.dtype)

    return actor_kernel


@functools.partial(jax.jit, static_argnames=("act_limit", "tile_b"))
def actor_forward(obs, params, act_limit, tile_b=1024):
    """obs: (B, obs_dim) f32.  params: dict of f32 weights in (in, out) layout."""
    B, obs_dim = obs.shape
    hidden = params["w1"].shape[1]
    act_dim = params["w3"].shape[1]
    act_pad = _round_up(max(act_dim, 128), 128)      # lane-dense matmul/out slab

    # ---- MXU-aligned batch tile -----------------------------------------
    # Multiple of 256 in [256, 4096]; never bigger than the 256-aligned batch;
    # for large batches cap so the grid keeps >=4 steps (v7x dual-TC sharding).
    tile_b = _round_up(max(256, min(int(tile_b), 4096)), 256)
    tile_b = min(tile_b, _round_up(B, 256))
    if B >= 2 * 256:
        tile_b = min(tile_b, max(256, _round_up(pl.cdiv(B, 4), 256)))
    b_pad = _round_up(B, tile_b)

    # obs stays f32 (cast to bf16 inside the kernel); only pad the batch dim.
    obs_p = obs if b_pad == B else jnp.pad(obs, ((0, b_pad - B), (0, 0)))

    # Weights: bf16 for the MXU; biases / LN params stay f32 (post-accumulate).
    w1 = params["w1"].astype(jnp.bfloat16)
    w2 = params["w2"].astype(jnp.bfloat16)
    w3 = jnp.pad(params["w3"], ((0, 0), (0, act_pad - act_dim))).astype(jnp.bfloat16)
    b1 = params["b1"]
    b2 = params["b2"]
    b3 = jnp.pad(params["b3"], ((0, 0), (0, act_pad - act_dim)))
    gamma = params["gamma"]
    beta = params["beta"]

    grid = (b_pad // tile_b,)
    const = lambda i: (0, 0)                          # weights: resident full block

    flops = 2 * b_pad * (obs_dim * hidden + hidden * hidden + hidden * act_pad)
    bytes_accessed = (
        obs_p.size * 4 + b_pad * act_pad * 2          # f32 obs in, bf16 out
        + (w1.size + w2.size + w3.size) * 2
        + (b1.size + b2.size + b3.size + gamma.size + beta.size) * 4)

    out = pl.pallas_call(
        make_actor_kernel(float(act_limit)),
        out_shape=jax.ShapeDtypeStruct((b_pad, act_pad), jnp.bfloat16),
        grid=grid,
        in_specs=[
            pl.BlockSpec((tile_b, obs_dim), lambda i: (i, 0)),   # obs (pipelined)
            pl.BlockSpec((obs_dim, hidden), const),              # w1
            pl.BlockSpec((1, hidden), const),                    # b1
            pl.BlockSpec((1, hidden), const),                    # gamma
            pl.BlockSpec((1, hidden), const),                    # beta
            pl.BlockSpec((hidden, hidden), const),               # w2
            pl.BlockSpec((1, hidden), const),                    # b2
            pl.BlockSpec((hidden, act_pad), const),               # w3 (lane-padded)
            pl.BlockSpec((1, act_pad), const),                    # b3 (lane-padded)
        ],
        out_specs=pl.BlockSpec((tile_b, act_pad), lambda i: (i, 0)),
        compiler_params=pltpu.CompilerParams(
            dimension_semantics=("parallel",)),
        cost_estimate=pl.CostEstimate(
            flops=flops,
            transcendentals=b_pad * (act_pad + 1),
            bytes_accessed=bytes_accessed),
    )(obs_p, w1, b1, gamma, beta, w2, b2, w3, b3)

    # Valid window, restored to the module's f32 output dtype (tiny slice).
    return out[:B, :act_dim].astype(jnp.float32)


def init_params(key, obs_dim, act_dim, hidden=HIDDEN):
    """Deterministic synthetic init (PyTorch-style uniform +-1/sqrt(fan_in))."""
    ks = jax.random.split(key, 6)

    def lin(kw, kb, fan_in, fan_out):
        bound = 1.0 / jnp.sqrt(fan_in)
        w = jax.random.uniform(kw, (fan_in, fan_out), jnp.float32, -bound, bound)
        b = jax.random.uniform(kb, (1, fan_out), jnp.float32, -bound, bound)
        return w, b

    w1, b1 = lin(ks[0], ks[1], obs_dim, hidden)
    w2, b2 = lin(ks[2], ks[3], hidden, hidden)
    w3, b3 = lin(ks[4], ks[5], hidden, act_dim)
    return {
        "w1": w1, "b1": b1,
        "gamma": jnp.ones((1, hidden), jnp.float32),   # LayerNorm weight
        "beta": jnp.zeros((1, hidden), jnp.float32),   # LayerNorm bias
        "w2": w2, "b2": b2,
        "w3": w3, "b3": b3,
    }


def actor_reference(obs, params, act_limit, emulate_bf16=True):
    """Pure-JAX reference; optionally emulates the kernel's bf16 matmul inputs."""
    if emulate_bf16:
        cast = lambda x: x.astype(jnp.bfloat16).astype(jnp.float32)
    else:
        cast = lambda x: x
    h = jnp.maximum(cast(obs) @ cast(params["w1"]) + params["b1"], 0.0)
    mu = jnp.mean(h, axis=-1, keepdims=True)
    var = jnp.mean((h - mu) ** 2, axis=-1, keepdims=True)
    h = (h - mu) / jnp.sqrt(var + LN_EPS) * params["gamma"] + params["beta"]
    h = jnp.maximum(cast(h) @ cast(params["w2"]) + params["b2"], 0.0)
    z = cast(h) @ cast(params["w3"]) + params["b3"]
    return act_limit * jax.nn.sigmoid(z)


if __name__ == "__main__":
    key = jax.random.PRNGKey(0)
    obs_dim, act_dim, act_limit = 16, 4, 1.0

    # Small sanity check (single grid step).
    batch = 8
    k_obs, k_par, k_obs2 = jax.random.split(key, 3)
    obs = jax.random.normal(k_obs, (batch, obs_dim), jnp.float32)
    params = init_params(k_par, obs_dim, act_dim)

    out = jax.block_until_ready(actor_forward(obs, params, act_limit))
    ref = actor_reference(obs, params, act_limit)
    assert out.shape == (batch, act_dim)
    assert jnp.allclose(out, ref, atol=2e-2, rtol=2e-2)

    # Multi-tile check (exercises batch-grid pipelining + padding; requested
    # tile_b=64 is rounded up to the 256-row MXU-aligned minimum -> grid=(2,)).
    batch2 = 300
    obs2 = jax.random.normal(k_obs2, (batch2, obs_dim), jnp.float32)
    out2 = jax.block_until_ready(actor_forward(obs2, params, act_limit, tile_b=64))
    ref2 = actor_reference(obs2, params, act_limit)
    assert out2.shape == (batch2, act_dim)
    assert jnp.allclose(out2, ref2, atol=2e-2, rtol=2e-2)

    print("KERNEL_OK")
</pallas_src>

<mosaic_0001>
module attributes {stable_mosaic.version = 11 : i64} {
  func.func @actor_kernel(%arg0: i32, %arg1: memref<256x16xf32, #tpu.memory_space<vmem>>, %arg2: memref<16x256xbf16, #tpu.memory_space<vmem>>, %arg3: memref<1x256xf32, #tpu.memory_space<vmem>>, %arg4: memref<1x256xf32, #tpu.memory_space<vmem>>, %arg5: memref<1x256xf32, #tpu.memory_space<vmem>>, %arg6: memref<256x256xbf16, #tpu.memory_space<vmem>>, %arg7: memref<1x256xf32, #tpu.memory_space<vmem>>, %arg8: memref<256x128xbf16, #tpu.memory_space<vmem>>, %arg9: memref<1x128xf32, #tpu.memory_space<vmem>>, %arg10: memref<256x128xbf16, #tpu.memory_space<vmem>>) attributes {dimension_semantics = [#tpu.dimension_semantics<parallel>], iteration_bounds = array<i64: 1>, scalar_prefetch = 0 : i64, scratch_operands = 0 : i64, tpu.core_type = #tpu.core_type<tc>, window_params = [{transform_indices = @transform_0, window_bounds = array<i64: 256, 16>}, {pipeline_mode = #tpu.pipeline_mode<synchronous>, transform_indices = @transform_1, window_bounds = array<i64: 16, 256>}, {pipeline_mode = #tpu.pipeline_mode<synchronous>, transform_indices = @transform_2, window_bounds = array<i64: 1, 256>}, {pipeline_mode = #tpu.pipeline_mode<synchronous>, transform_indices = @transform_3, window_bounds = array<i64: 1, 256>}, {pipeline_mode = #tpu.pipeline_mode<synchronous>, transform_indices = @transform_4, window_bounds = array<i64: 1, 256>}, {pipeline_mode = #tpu.pipeline_mode<synchronous>, transform_indices = @transform_5, window_bounds = array<i64: 256, 256>}, {pipeline_mode = #tpu.pipeline_mode<synchronous>, transform_indices = @transform_6, window_bounds = array<i64: 1, 256>}, {pipeline_mode = #tpu.pipeline_mode<synchronous>, transform_indices = @transform_7, window_bounds = array<i64: 256, 128>}, {pipeline_mode = #tpu.pipeline_mode<synchronous>, transform_indices = @transform_8, window_bounds = array<i64: 1, 128>}, {transform_indices = @transform_9, window_bounds = array<i64: 256, 128>}]} {
    %c0 = arith.constant 0 : index
    %c0_0 = arith.constant 0 : index
    %0 = vector.load %arg1[%c0, %c0_0] : memref<256x16xf32, #tpu.memory_space<vmem>>, vector<256x16xf32>
    %1 = arith.truncf %0 : vector<256x16xf32> to vector<256x16xbf16>
    %c0_1 = arith.constant 0 : index
    %c0_2 = arith.constant 0 : index
    %2 = vector.load %arg2[%c0_1, %c0_2] : memref<16x256xbf16, #tpu.memory_space<vmem>>, vector<16x256xbf16>
    %cst = arith.constant dense<0.000000e+00> : vector<256x256xf32>
    %3 = tpu.matmul %1, %2, %cst {dimension_numbers = #tpu.dot_dimension_numbers<[1], [0], [0], [1], [0, 0, 1, 1], [], []>} : vector<256x16xbf16>, vector<16x256xbf16>, vector<256x256xf32> -> vector<256x256xf32>
    %c0_3 = arith.constant 0 : index
    %c0_4 = arith.constant 0 : index
    %4 = vector.load %arg3[%c0_3, %c0_4] : memref<1x256xf32, #tpu.memory_space<vmem>>, vector<1x256xf32>
    %5 = vector.broadcast %4 : vector<1x256xf32> to vector<256x256xf32>
    %6 = arith.addf %3, %5 : vector<256x256xf32>
    %cst_5 = arith.constant 0.000000e+00 : f32
    %7 = vector.broadcast %cst_5 : f32 to vector<256x256xf32>
    %8 = arith.maximumf %6, %7 : vector<256x256xf32>
    %cst_6 = arith.constant dense<0.000000e+00> : vector<256xf32>
    %9 = vector.multi_reduction <add>, %8, %cst_6 [1] : vector<256x256xf32> to vector<256xf32>
    %10 = vector.shape_cast %9 : vector<256xf32> to vector<256x1xf32>
    %cst_7 = arith.constant 2.560000e+02 : f32
    %11 = vector.broadcast %cst_7 : f32 to vector<256x1xf32>
    %12 = arith.divf %10, %11 : vector<256x1xf32>
    %13 = arith.mulf %8, %8 : vector<256x256xf32>
    %cst_8 = arith.constant dense<0.000000e+00> : vector<256xf32>
    %14 = vector.multi_reduction <add>, %13, %cst_8 [1] : vector<256x256xf32> to vector<256xf32>
    %15 = vector.shape_cast %14 : vector<256xf32> to vector<256x1xf32>
    %cst_9 = arith.constant 2.560000e+02 : f32
    %16 = vector.broadcast %cst_9 : f32 to vector<256x1xf32>
    %17 = arith.divf %15, %16 : vector<256x1xf32>
    %18 = arith.mulf %12, %12 : vector<256x1xf32>
    %19 = arith.subf %17, %18 : vector<256x1xf32>
    %cst_10 = arith.constant 0.000000e+00 : f32
    %20 = vector.broadcast %cst_10 : f32 to vector<256x1xf32>
    %21 = arith.maximumf %19, %20 : vector<256x1xf32>
    %cst_11 = arith.constant 9.99999974E-6 : f32
    %22 = vector.broadcast %cst_11 : f32 to vector<256x1xf32>
    %23 = arith.addf %21, %22 : vector<256x1xf32>
    %24 = math.rsqrt %23 : vector<256x1xf32>
    %c0_12 = arith.constant 0 : index
    %c0_13 = arith.constant 0 : index
    %25 = vector.load %arg4[%c0_12, %c0_13] : memref<1x256xf32, #tpu.memory_space<vmem>>, vector<1x256xf32>
    %26 = vector.broadcast %25 : vector<1x256xf32> to vector<256x256xf32>
    %27 = vector.broadcast %24 : vector<256x1xf32> to vector<256x256xf32>
    %28 = arith.mulf %26, %27 : vector<256x256xf32>
    %29 = vector.broadcast %12 : vector<256x1xf32> to vector<256x256xf32>
    %30 = arith.subf %8, %29 : vector<256x256xf32>
    %31 = arith.mulf %30, %28 : vector<256x256xf32>
    %c0_14 = arith.constant 0 : index
    %c0_15 = arith.constant 0 : index
    %32 = vector.load %arg5[%c0_14, %c0_15] : memref<1x256xf32, #tpu.memory_space<vmem>>, vector<1x256xf32>
    %33 = vector.broadcast %32 : vector<1x256xf32> to vector<256x256xf32>
    %34 = arith.addf %31, %33 : vector<256x256xf32>
    %35 = arith.truncf %34 : vector<256x256xf32> to vector<256x256xbf16>
    %c0_16 = arith.constant 0 : index
    %c0_17 = arith.constant 0 : index
    %36 = vector.load %arg6[%c0_16, %c0_17] : memref<256x256xbf16, #tpu.memory_space<vmem>>, vector<256x256xbf16>
    %cst_18 = arith.constant dense<0.000000e+00> : vector<256x256xf32>
    %37 = tpu.matmul %35, %36, %cst_18 {dimension_numbers = #tpu.dot_dimension_numbers<[1], [0], [0], [1], [0, 0, 1, 1], [], []>} : vector<256x256xbf16>, vector<256x256xbf16>, vector<256x256xf32> -> vector<256x256xf32>
    %c0_19 = arith.constant 0 : index
    %c0_20 = arith.constant 0 : index
    %38 = vector.load %arg7[%c0_19, %c0_20] : memref<1x256xf32, #tpu.memory_space<vmem>>, vector<1x256xf32>
    %39 = vector.broadcast %38 : vector<1x256xf32> to vector<256x256xf32>
    %40 = arith.addf %37, %39 : vector<256x256xf32>
    %cst_21 = arith.constant 0.000000e+00 : f32
    %41 = vector.broadcast %cst_21 : f32 to vector<256x256xf32>
    %42 = arith.maximumf %40, %41 : vector<256x256xf32>
    %43 = arith.truncf %42 : vector<256x256xf32> to vector<256x256xbf16>
    %c0_22 = arith.constant 0 : index
    %c0_23 = arith.constant 0 : index
    %44 = vector.load %arg8[%c0_22, %c0_23] : memref<256x128xbf16, #tpu.memory_space<vmem>>, vector<256x128xbf16>
    %cst_24 = arith.constant dense<0.000000e+00> : vector<256x128xf32>
    %45 = tpu.matmul %43, %44, %cst_24 {dimension_numbers = #tpu.dot_dimension_numbers<[1], [0], [0], [1], [0, 0, 1, 1], [], []>} : vector<256x256xbf16>, vector<256x128xbf16>, vector<256x128xf32> -> vector<256x128xf32>
    %c0_25 = arith.constant 0 : index
    %c0_26 = arith.constant 0 : index
    %46 = vector.load %arg9[%c0_25, %c0_26] : memref<1x128xf32, #tpu.memory_space<vmem>>, vector<1x128xf32>
    %47 = vector.broadcast %46 : vector<1x128xf32> to vector<256x128xf32>
    %48 = arith.addf %45, %47 : vector<256x128xf32>
    %49 = arith.negf %48 : vector<256x128xf32>
    %50 = math.exp %49 : vector<256x128xf32>
    %cst_27 = arith.constant 1.000000e+00 : f32
    %51 = vector.broadcast %cst_27 : f32 to vector<256x128xf32>
    %52 = arith.addf %51, %50 : vector<256x128xf32>
    %53 = arith.divf %51, %52 : vector<256x128xf32>
    %cst_28 = arith.constant 1.000000e+00 : f32
    %54 = vector.broadcast %cst_28 : f32 to vector<256x128xf32>
    %55 = arith.mulf %54, %53 : vector<256x128xf32>
    %56 = arith.truncf %55 : vector<256x128xf32> to vector<256x128xbf16>
    %c0_29 = arith.constant 0 : index
    %c0_30 = arith.constant 0 : index
    %57 = vector.load %arg10[%c0_29, %c0_30] : memref<256x128xbf16, #tpu.memory_space<vmem>>, vector<256x128xbf16>
    tpu.vector_store %arg10[%c0_29, %c0_30], %56 {strides = array<i32>} : memref<256x128xbf16, #tpu.memory_space<vmem>>, vector<256x128xbf16>,
    return
  }
  func.func @transform_0(%arg0: i32) -> (i32, i32) {
    %c0_i32 = arith.constant 0 : i32
    %c0_i32_0 = arith.constant 0 : i32
    return %arg0, %c0_i32 : i32, i32
  }
  func.func @transform_1(%arg0: i32) -> (i32, i32) {
    %c0_i32 = arith.constant 0 : i32
    %c0_i32_0 = arith.constant 0 : i32
    %c0_i32_1 = arith.constant 0 : i32
    return %c0_i32, %c0_i32_0 : i32, i32
  }
  func.func @transform_2(%arg0: i32) -> (i32, i32) {
    %c0_i32 = arith.constant 0 : i32
    %c0_i32_0 = arith.constant 0 : i32
    %c0_i32_1 = arith.constant 0 : i32
    return %c0_i32, %c0_i32_0 : i32, i32
  }
  func.func @transform_3(%arg0: i32) -> (i32, i32) {
    %c0_i32 = arith.constant 0 : i32
    %c0_i32_0 = arith.constant 0 : i32
    %c0_i32_1 = arith.constant 0 : i32
    return %c0_i32, %c0_i32_0 : i32, i32
  }
  func.func @transform_4(%arg0: i32) -> (i32, i32) {
    %c0_i32 = arith.constant 0 : i32
    %c0_i32_0 = arith.constant 0 : i32
    %c0_i32_1 = arith.constant 0 : i32
    return %c0_i32, %c0_i32_0 : i32, i32
  }
  func.func @transform_5(%arg0: i32) -> (i32, i32) {
    %c0_i32 = arith.constant 0 : i32
    %c0_i32_0 = arith.constant 0 : i32
    %c0_i32_1 = arith.constant 0 : i32
    return %c0_i32, %c0_i32_0 : i32, i32
  }
  func.func @transform_6(%arg0: i32) -> (i32, i32) {
    %c0_i32 = arith.constant 0 : i32
    %c0_i32_0 = arith.constant 0 : i32
    %c0_i32_1 = arith.constant 0 : i32
    return %c0_i32, %c0_i32_0 : i32, i32
  }
  func.func @transform_7(%arg0: i32) -> (i32, i32) {
    %c0_i32 = arith.constant 0 : i32
    %c0_i32_0 = arith.constant 0 : i32
    %c0_i32_1 = arith.constant 0 : i32
    return %c0_i32, %c0_i32_0 : i32, i32
  }
  func.func @transform_8(%arg0: i32) -> (i32, i32) {
    %c0_i32 = arith.constant 0 : i32
    %c0_i32_0 = arith.constant 0 : i32
    %c0_i32_1 = arith.constant 0 : i32
    return %c0_i32, %c0_i32_0 : i32, i32
  }
  func.func @transform_9(%arg0: i32) -> (i32, i32) {
    %c0_i32 = arith.constant 0 : i32
    %c0_i32_0 = arith.constant 0 : i32
    return %arg0, %c0_i32 : i32, i32
  }
}

</mosaic_0001>

<llo_original>
// kernel: actor_forward.1
$region0: #{actor_forward.1}
  #allocation0 [shape = 'u32[]', space=smem, size = 0x4, offset = 0x4, fixed_abs, tag = 'smem constant byte address 0x4 - core index']
  #allocation1 [shape = 'u32[144,128]{1,0:T(1,128)}', space=vmem, size = 0x12000, scoped, tag = 'internal scratch']
  %s0 = inlined_call_operand.vmem [shape: f32[256,16], index: 0, kind: input, shape index: {}]
  %s1 = inlined_call_operand.vmem [shape: bf16[16,256], index: 1, kind: input, shape index: {}]
  %s2 = inlined_call_operand.vmem [shape: f32[1,256], index: 2, kind: input, shape index: {}]
  %s3 = inlined_call_operand.vmem [shape: f32[1,256], index: 3, kind: input, shape index: {}]
  %s4 = inlined_call_operand.vmem [shape: f32[1,256], index: 4, kind: input, shape index: {}]
  %s5 = inlined_call_operand.vmem [shape: bf16[256,256], index: 5, kind: input, shape index: {}]
  %s6 = inlined_call_operand.vmem [shape: f32[1,256], index: 6, kind: input, shape index: {}]
  %s7 = inlined_call_operand.vmem [shape: bf16[256,128], index: 7, kind: input, shape index: {}]
  %s8 = inlined_call_operand.vmem [shape: f32[1,128], index: 8, kind: input, shape index: {}]
  %s9 = inlined_call_operand.vmem [shape: bf16[256,128], index: 9, kind: output, shape index: {}]
  %s10 = sld [smem:[#allocation0]]
  $region46: #{actor_forward.1} parent=0
    _
  %s12 = ssub.s32 1, %s10
  %s13 = scalar_select 0, %s12, %s10
  // Predicated region
  $region2: #{actor_forward.1} parent=0 // pred_check
    _
  $region3: #{actor_forward.1} parent=0 // pred_check_branch
    %15 = sbr.rel (0) target = $region5
  $region4: #{actor_forward.1} parent=0 // pred_region
    _
  $region5: #{actor_forward.1} parent=0 // pred_fallthru
    _
  // Predicated region
  $region6: #{actor_forward.1} parent=0 // pred_check
    _
  $region7: #{actor_forward.1} parent=0 // pred_check_branch
    %17 = sbr.rel (0) target = $region9
  $region8: #{actor_forward.1} parent=0 // pred_region
    _
  $region9: #{actor_forward.1} parent=0 // pred_fallthru
    _
  // Predicated region
  $region10: #{actor_forward.1} parent=0 // pred_check
    _
  $region11: #{actor_forward.1} parent=0 // pred_check_branch
    %19 = sbr.rel (0) target = $region13
  $region12: #{actor_forward.1} parent=0 // pred_region
    _
  $region13: #{actor_forward.1} parent=0 // pred_fallthru
    _
  // Predicated region
  $region14: #{actor_forward.1} parent=0 // pred_check
    _
  $region15: #{actor_forward.1} parent=0 // pred_check_branch
    %21 = sbr.rel (0) target = $region17
  $region16: #{actor_forward.1} parent=0 // pred_region
    _
  $region17: #{actor_forward.1} parent=0 // pred_fallthru
    _
  // Predicated region
  $region18: #{actor_forward.1} parent=0 // pred_check
    _
  $region19: #{actor_forward.1} parent=0 // pred_check_branch
    %23 = sbr.rel (0) target = $region21
  $region20: #{actor_forward.1} parent=0 // pred_region
    _
  $region21: #{actor_forward.1} parent=0 // pred_fallthru
    _
  // Predicated region
  $region22: #{actor_forward.1} parent=0 // pred_check
    _
  $region23: #{actor_forward.1} parent=0 // pred_check_branch
    %25 = sbr.rel (0) target = $region25
  $region24: #{actor_forward.1} parent=0 // pred_region
    _
  $region25: #{actor_forward.1} parent=0 // pred_fallthru
    _
  // Predicated region
  $region26: #{actor_forward.1} parent=0 // pred_check
    _
  $region27: #{actor_forward.1} parent=0 // pred_check_branch
    %27 = sbr.rel (0) target = $region29
  $region28: #{actor_forward.1} parent=0 // pred_region
    _
  $region29: #{actor_forward.1} parent=0 // pred_fallthru
    _
  // Predicated region
  $region30: #{actor_forward.1} parent=0 // pred_check
    _
  $region31: #{actor_forward.1} parent=0 // pred_check_branch
    %29 = sbr.rel (0) target = $region33
  $region32: #{actor_forward.1} parent=0 // pred_region
    _
  $region33: #{actor_forward.1} parent=0 // pred_fallthru
    _
  // Predicated region
  $region34: #{actor_forward.1} parent=0 // pred_check
    _
  $region35: #{actor_forward.1} parent=0 // pred_check_branch
    %31 = sbr.rel (0) target = $region37
  $region36: #{actor_forward.1} parent=0 // pred_region
    _
  $region37: #{actor_forward.1} parent=0 // pred_fallthru
    _
  %v33 = vld [vmem:[%s0] sm:$0xff]
  %v34 = vld [vmem:[%s0 + $0x8] sm:$0xff]
  %v35 = vld [vmem:[%s0 + $0x10] sm:$0xff]
  %v36 = vld [vmem:[%s0 + $0x18] sm:$0xff]
  %v37 = vld [vmem:[%s0 + $0x20] sm:$0xff]
  %v38 = vld [vmem:[%s0 + $0x28] sm:$0xff]
  %v39 = vld [vmem:[%s0 + $0x30] sm:$0xff]
  %v40 = vld [vmem:[%s0 + $0x38] sm:$0xff]
  %v41 = vld [vmem:[%s0 + $0x40] sm:$0xff]
  %v42 = vld [vmem:[%s0 + $0x48] sm:$0xff]
  %v43 = vld [vmem:[%s0 + $0x50] sm:$0xff]
  %v44 = vld [vmem:[%s0 + $0x58] sm:$0xff]
  %v45 = vld [vmem:[%s0 + $0x60] sm:$0xff]
  %v46 = vld [vmem:[%s0 + $0x68] sm:$0xff]
  %v47 = vld [vmem:[%s0 + $0x70] sm:$0xff]
  %v48 = vld [vmem:[%s0 + $0x78] sm:$0xff]
  %v49 = vld [vmem:[%s0 + $0x80] sm:$0xff]
  %v50 = vld [vmem:[%s0 + $0x88] sm:$0xff]
  %v51 = vld [vmem:[%s0 + $0x90] sm:$0xff]
  %v52 = vld [vmem:[%s0 + $0x98] sm:$0xff]
  %v53 = vld [vmem:[%s0 + $0xa0] sm:$0xff]
  %v54 = vld [vmem:[%s0 + $0xa8] sm:$0xff]
  %v55 = vld [vmem:[%s0 + $0xb0] sm:$0xff]
  %v56 = vld [vmem:[%s0 + $0xb8] sm:$0xff]
  %v57 = vld [vmem:[%s0 + $0xc0] sm:$0xff]
  %v58 = vld [vmem:[%s0 + $0xc8] sm:$0xff]
  %v59 = vld [vmem:[%s0 + $0xd0] sm:$0xff]
  %v60 = vld [vmem:[%s0 + $0xd8] sm:$0xff]
  %v61 = vld [vmem:[%s0 + $0xe0] sm:$0xff]
  %v62 = vld [vmem:[%s0 + $0xe8] sm:$0xff]
  %v63 = vld [vmem:[%s0 + $0xf0] sm:$0xff]
  %v64 = vld [vmem:[%s0 + $0xf8] sm:$0xff]
  %v65 = vpack.c.bf16 %v34, %v33
  %v66 = vpack.c.bf16 %v36, %v35
  %v67 = vpack.c.bf16 %v38, %v37
  %v68 = vpack.c.bf16 %v40, %v39
  %v69 = vpack.c.bf16 %v42, %v41
  %v70 = vpack.c.bf16 %v44, %v43
  %v71 = vpack.c.bf16 %v46, %v45
  %v72 = vpack.c.bf16 %v48, %v47
  %v73 = vpack.c.bf16 %v50, %v49
  %v74 = vpack.c.bf16 %v52, %v51
  %v75 = vpack.c.bf16 %v54, %v53
  %v76 = vpack.c.bf16 %v56, %v55
  %v77 = vpack.c.bf16 %v58, %v57
  %v78 = vpack.c.bf16 %v60, %v59
  %v79 = vpack.c.bf16 %v62, %v61
  %v80 = vpack.c.bf16 %v64, %v63
  %v81 = vld [vmem:[%s1] sm:$0xff]
  %v82 = vld [vmem:[%s1 + $0x8] sm:$0xff]
  %v83 = vld [vmem:[%s2] sm:$0x3]
  %v85 = vlaneseq
  %v86 = vshrl.u32 %v85, 7
  %v87 = vsub.s32 0, %v86
  %v88 = vrot.slane %v83, %v87
  %v89 = vlaneseq
  %v90 = vshrl.u32 %v89, 7
  %v91 = vsub.s32 1, %v90
  %v92 = vrot.slane %v83, %v91
  %v97 = vunpack.c.l.b16 %v81
  %v98 = vunpack.c.h.b16 %v81
  %v99 = vunpack.c.l.b16 %v82
  %v100 = vunpack.c.h.b16 %v82
  %v101 = vpack.c.b16 %v99, %v97
  %v102 = vpack.c.b16 %v100, %v98
  %vm105 = vcmask 130048
  %v107 = vsel %vm105, %v65, 0
  %v110 = vsel %vm105, %v66, 0
  %v113 = vsel %vm105, %v67, 0
  %v116 = vsel %vm105, %v68, 0
  %v119 = vsel %vm105, %v69, 0
  %v122 = vsel %vm105, %v70, 0
  %v125 = vsel %vm105, %v71, 0
  %v128 = vsel %vm105, %v72, 0
  %v131 = vsel %vm105, %v73, 0
  %v134 = vsel %vm105, %v74, 0
  %v137 = vsel %vm105, %v75, 0
  %v140 = vsel %vm105, %v76, 0
  %v143 = vsel %vm105, %v77, 0
  %v146 = vsel %vm105, %v78, 0
  %v149 = vsel %vm105, %v79, 0
  %v152 = vsel %vm105, %v80, 0
  %154 = vmatprep.subr.bf16.mxu0 %v102
  %155 = vmatpush1.bf16.msra.mxu0 %v101
  %156 = vmatprep.subr.bf16.mxu0 0
  %157 = vmatpush1.bf16.msra.mxu0 0
  %158 = vmatprep.subr.bf16.mxu0 0
  %159 = vmatpush1.bf16.msra.mxu0 0
  %160 = vmatprep.subr.bf16.mxu0 0
  %161 = vmatpush1.bf16.msra.mxu0 0
  %162 = vmatprep.subr.bf16.mxu0 0
  %163 = vmatpush1.bf16.msra.mxu0 0
  %164 = vmatprep.subr.bf16.mxu0 0
  %165 = vmatpush1.bf16.msra.mxu0 0
  %166 = vmatprep.subr.bf16.mxu0 0
  %167 = vmatpush1.bf16.msra.mxu0 0
  %168 = vmatprep.subr.bf16.mxu0 0
  %169 = vmatpush1.bf16.msra.mxu0 0
  %170 = vmatprep.subr.bf16.mxu0 0
  %171 = vmatpush1.bf16.msra.mxu0 0
  %172 = vmatprep.subr.bf16.mxu0 0
  %173 = vmatpush1.bf16.msra.mxu0 0
  %174 = vmatprep.subr.bf16.mxu0 0
  %175 = vmatpush1.bf16.msra.mxu0 0
  %176 = vmatprep.subr.bf16.mxu0 0
  %177 = vmatpush1.bf16.msra.mxu0 0
  %178 = vmatprep.subr.bf16.mxu0 0
  %179 = vmatpush1.bf16.msra.mxu0 0
  %180 = vmatprep.subr.bf16.mxu0 0
  %181 = vmatpush1.bf16.msra.mxu0 0
  %182 = vmatprep.subr.bf16.mxu0 0
  %183 = vmatpush1.bf16.msra.mxu0 0
  %184 = vmatprep.subr.bf16.mxu0 0
  %185 = vmatpush1.bf16.msra.mxu0 0
  %186 = vmatprep.mubr.bf16.mxu0 0
  %187 = vmatmul.mubr.bf16.gmra.mrb[0].mxu0 %v107
  %v188 = vpop.f32.mrb[0].mxu0
  %v189 = vadd.f32 %v88, %v188
  %v190 = vpop.f32.mrb[0].mxu0
  %v191 = vadd.f32 %v92, %v190
  %v192 = vpop.f32.mrb[0].mxu0
  %v193 = vadd.f32 %v88, %v192
  %v194 = vpop.f32.mrb[0].mxu0
  %v195 = vadd.f32 %v92, %v194
  %196 = vmatprep.mubr.bf16.mxu0 0
  %197 = vmatmul.mubr.bf16.gmra.mrb[0].mxu0 %v110
  %v198 = vpop.f32.mrb[0].mxu0
  %v199 = vadd.f32 %v88, %v198
  %v200 = vpop.f32.mrb[0].mxu0
  %v201 = vadd.f32 %v92, %v200
  %v202 = vpop.f32.mrb[0].mxu0
  %v203 = vadd.f32 %v88, %v202
  %v204 = vpop.f32.mrb[0].mxu0
  %v205 = vadd.f32 %v92, %v204
  %206 = vmatprep.mubr.bf16.mxu0 0
  %207 = vmatmul.mubr.bf16.gmra.mrb[0].mxu0 %v113
  %v208 = vpop.f32.mrb[0].mxu0
  %v209 = vadd.f32 %v88, %v208
  %v210 = vpop.f32.mrb[0].mxu0
  %v211 = vadd.f32 %v92, %v210
  %v212 = vpop.f32.mrb[0].mxu0
  %v213 = vadd.f32 %v88, %v212
  %v214 = vpop.f32.mrb[0].mxu0
  %v215 = vadd.f32 %v92, %v214
  %216 = vmatprep.mubr.bf16.mxu0 0
  %217 = vmatmul.mubr.bf16.gmra.mrb[0].mxu0 %v116
  %v218 = vpop.f32.mrb[0].mxu0
  %v219 = vadd.f32 %v88, %v218
  %v220 = vpop.f32.mrb[0].mxu0
  %v221 = vadd.f32 %v92, %v220
  %v222 = vpop.f32.mrb[0].mxu0
  %v223 = vadd.f32 %v88, %v222
  %v224 = vpop.f32.mrb[0].mxu0
  %v225 = vadd.f32 %v92, %v224
  %226 = vmatprep.mubr.bf16.mxu0 0
  %227 = vmatmul.mubr.bf16.gmra.mrb[0].mxu0 %v119
  %v228 = vpop.f32.mrb[0].mxu0
  %v229 = vadd.f32 %v88, %v228
  %v230 = vpop.f32.mrb[0].mxu0
  %v231 = vadd.f32 %v92, %v230
  %v232 = vpop.f32.mrb[0].mxu0
  %v233 = vadd.f32 %v88, %v232
  %v234 = vpop.f32.mrb[0].mxu0
  %v235 = vadd.f32 %v92, %v234
  %236 = vmatprep.mubr.bf16.mxu0 0
  %237 = vmatmul.mubr.bf16.gmra.mrb[0].mxu0 %v122
  %v238 = vpop.f32.mrb[0].mxu0
  %v239 = vadd.f32 %v88, %v238
  %v240 = vpop.f32.mrb[0].mxu0
  %v241 = vadd.f32 %v92, %v240
  %v242 = vpop.f32.mrb[0].mxu0
  %v243 = vadd.f32 %v88, %v242
  %v244 = vpop.f32.mrb[0].mxu0
  %v245 = vadd.f32 %v92, %v244
  %246 = vmatprep.mubr.bf16.mxu0 0
  %247 = vmatmul.mubr.bf16.gmra.mrb[0].mxu0 %v125
  %v248 = vpop.f32.mrb[0].mxu0
  %v249 = vadd.f32 %v88, %v248
  %v250 = vpop.f32.mrb[0].mxu0
  %v251 = vadd.f32 %v92, %v250
  %v252 = vpop.f32.mrb[0].mxu0
  %v253 = vadd.f32 %v88, %v252
  %v254 = vpop.f32.mrb[0].mxu0
  %v255 = vadd.f32 %v92, %v254
  %256 = vmatprep.mubr.bf16.mxu0 0
  %257 = vmatmul.mubr.bf16.gmra.mrb[0].mxu0 %v128
  %v258 = vpop.f32.mrb[0].mxu0
  %v259 = vadd.f32 %v88, %v258
  %v260 = vpop.f32.mrb[0].mxu0
  %v261 = vadd.f32 %v92, %v260
  %v262 = vpop.f32.mrb[0].mxu0
  %v263 = vadd.f32 %v88, %v262
  %v264 = vpop.f32.mrb[0].mxu0
  %v265 = vadd.f32 %v92, %v264
  %266 = vmatprep.mubr.bf16.mxu0 0
  %267 = vmatmul.mubr.bf16.gmra.mrb[0].mxu0 %v131
  %v268 = vpop.f32.mrb[0].mxu0
  %v269 = vadd.f32 %v88, %v268
  %v270 = vpop.f32.mrb[0].mxu0
  %v271 = vadd.f32 %v92, %v270
  %v272 = vpop.f32.mrb[0].mxu0
  %v273 = vadd.f32 %v88, %v272
  %v274 = vpop.f32.mrb[0].mxu0
  %v275 = vadd.f32 %v92, %v274
  %276 = vmatprep.mubr.bf16.mxu0 0
  %277 = vmatmul.mubr.bf16.gmra.mrb[0].mxu0 %v134
  %v278 = vpop.f32.mrb[0].mxu0
  %v279 = vadd.f32 %v88, %v278
  %v280 = vpop.f32.mrb[0].mxu0
  %v281 = vadd.f32 %v92, %v280
  %v282 = vpop.f32.mrb[0].mxu0
  %v283 = vadd.f32 %v88, %v282
  %v284 = vpop.f32.mrb[0].mxu0
  %v285 = vadd.f32 %v92, %v284
  %286 = vmatprep.mubr.bf16.mxu0 0
  %287 = vmatmul.mubr.bf16.gmra.mrb[0].mxu0 %v137
  %v288 = vpop.f32.mrb[0].mxu0
  %v289 = vadd.f32 %v88, %v288
  %v290 = vpop.f32.mrb[0].mxu0
  %v291 = vadd.f32 %v92, %v290
  %v292 = vpop.f32.mrb[0].mxu0
  %v293 = vadd.f32 %v88, %v292
  %v294 = vpop.f32.mrb[0].mxu0
  %v295 = vadd.f32 %v92, %v294
  %296 = vmatprep.mubr.bf16.mxu0 0
  %297 = vmatmul.mubr.bf16.gmra.mrb[0].mxu0 %v140
  %v298 = vpop.f32.mrb[0].mxu0
  %v299 = vadd.f32 %v88, %v298
  %v300 = vpop.f32.mrb[0].mxu0
  %v301 = vadd.f32 %v92, %v300
  %v302 = vpop.f32.mrb[0].mxu0
  %v303 = vadd.f32 %v88, %v302
  %v304 = vpop.f32.mrb[0].mxu0
  %v305 = vadd.f32 %v92, %v304
  %306 = vmatprep.mubr.bf16.mxu0 0
  %307 = vmatmul.mubr.bf16.gmra.mrb[0].mxu0 %v143
  %v308 = vpop.f32.mrb[0].mxu0
  %v309 = vadd.f32 %v88, %v308
  %v310 = vpop.f32.mrb[0].mxu0
  %v311 = vadd.f32 %v92, %v310
  %v312 = vpop.f32.mrb[0].mxu0
  %v313 = vadd.f32 %v88, %v312
  %v314 = vpop.f32.mrb[0].mxu0
  %v315 = vadd.f32 %v92, %v314
  %316 = vmatprep.mubr.bf16.mxu0 0
  %317 = vmatmul.mubr.bf16.gmra.mrb[0].mxu0 %v146
  %v318 = vpop.f32.mrb[0].mxu0
  %v319 = vadd.f32 %v88, %v318
  %v320 = vpop.f32.mrb[0].mxu0
  %v321 = vadd.f32 %v92, %v320
  %v322 = vpop.f32.mrb[0].mxu0
  %v323 = vadd.f32 %v88, %v322
  %v324 = vpop.f32.mrb[0].mxu0
  %v325 = vadd.f32 %v92, %v324
  %326 = vmatprep.mubr.bf16.mxu0 0
  %327 = vmatmul.mubr.bf16.gmra.mrb[0].mxu0 %v149
  %v328 = vpop.f32.mrb[0].mxu0
  %v329 = vadd.f32 %v88, %v328
  %v330 = vpop.f32.mrb[0].mxu0
  %v331 = vadd.f32 %v92, %v330
  %v332 = vpop.f32.mrb[0].mxu0
  %v333 = vadd.f32 %v88, %v332
  %v334 = vpop.f32.mrb[0].mxu0
  %v335 = vadd.f32 %v92, %v334
  %336 = vmatprep.mubr.bf16.mxu0 0
  %337 = vmatmul.mubr.bf16.gmra.mrb[0].mxu0 %v152
  %v338 = vpop.f32.mrb[0].mxu0
  %v339 = vadd.f32 %v88, %v338
  %v340 = vpop.f32.mrb[0].mxu0
  %v341 = vadd.f32 %v92, %v340
  %v342 = vpop.f32.mrb[0].mxu0
  %v343 = vadd.f32 %v88, %v342
  %v344 = vpop.f32.mrb[0].mxu0
  %v345 = vadd.f32 %v92, %v344
  %346 = vdwg.mxu0
  %v347 = vmax.f32 %v189, 0.0
  %v348 = vmax.f32 %v191, 0.0
  %v349 = vmax.f32 %v193, 0.0
  %v350 = vmax.f32 %v195, 0.0
  %v351 = vmax.f32 %v199, 0.0
  %v352 = vmax.f32 %v201, 0.0
  %v353 = vmax.f32 %v203, 0.0
  %v354 = vmax.f32 %v205, 0.0
  %v355 = vmax.f32 %v209, 0.0
  %v356 = vmax.f32 %v211, 0.0
  %v357 = vmax.f32 %v213, 0.0
  %v358 = vmax.f32 %v215, 0.0
  %v359 = vmax.f32 %v219, 0.0
  %v360 = vmax.f32 %v221, 0.0
  %v361 = vmax.f32 %v223, 0.0
  %v362 = vmax.f32 %v225, 0.0
  %v363 = vmax.f32 %v229, 0.0
  %v364 = vmax.f32 %v231, 0.0
  %v365 = vmax.f32 %v233, 0.0
  %v366 = vmax.f32 %v235, 0.0
  %v367 = vmax.f32 %v239, 0.0
  %v368 = vmax.f32 %v241, 0.0
  %v369 = vmax.f32 %v243, 0.0
  %v370 = vmax.f32 %v245, 0.0
  %v371 = vmax.f32 %v249, 0.0
  %v372 = vmax.f32 %v251, 0.0
  %v373 = vmax.f32 %v253, 0.0
  %v374 = vmax.f32 %v255, 0.0
  %v375 = vmax.f32 %v259, 0.0
  %v376 = vmax.f32 %v261, 0.0
  %v377 = vmax.f32 %v263, 0.0
  %v378 = vmax.f32 %v265, 0.0
  %v379 = vmax.f32 %v269, 0.0
  %v380 = vmax.f32 %v271, 0.0
  %v381 = vmax.f32 %v273, 0.0
  %v382 = vmax.f32 %v275, 0.0
  %v383 = vmax.f32 %v279, 0.0
  %v384 = vmax.f32 %v281, 0.0
  %v385 = vmax.f32 %v283, 0.0
  %v386 = vmax.f32 %v285, 0.0
  %v387 = vmax.f32 %v289, 0.0
  %v388 = vmax.f32 %v291, 0.0
  %v389 = vmax.f32 %v293, 0.0
  %v390 = vmax.f32 %v295, 0.0
  %v391 = vmax.f32 %v299, 0.0
  %v392 = vmax.f32 %v301, 0.0
  %v393 = vmax.f32 %v303, 0.0
  %v394 = vmax.f32 %v305, 0.0
  %v395 = vmax.f32 %v309, 0.0
  %v396 = vmax.f32 %v311, 0.0
  %v397 = vmax.f32 %v313, 0.0
  %v398 = vmax.f32 %v315, 0.0
  %v399 = vmax.f32 %v319, 0.0
  %v400 = vmax.f32 %v321, 0.0
  %v401 = vmax.f32 %v323, 0.0
  %v402 = vmax.f32 %v325, 0.0
  %v403 = vmax.f32 %v329, 0.0
  %v404 = vmax.f32 %v331, 0.0
  %v405 = vmax.f32 %v333, 0.0
  %v406 = vmax.f32 %v335, 0.0
  %v407 = vmax.f32 %v339, 0.0
  %v408 = vmax.f32 %v341, 0.0
  %v409 = vmax.f32 %v343, 0.0
  %v410 = vmax.f32 %v345, 0.0
  %v411 = vadd.f32 %v347, %v348
  %412 = vadd.xlane.f32.xlu0 %v411
  %v413 = vpop.xlane.xlu0 %412
  %v414 = vadd.f32 %v349, %v350
  %415 = vadd.xlane.f32.xlu0 %v414
  %v416 = vpop.xlane.xlu0 %415
  %v417 = vadd.f32 %v351, %v352
  %418 = vadd.xlane.f32.xlu0 %v417
  %v419 = vpop.xlane.xlu0 %418
  %v420 = vadd.f32 %v353, %v354
  %421 = vadd.xlane.f32.xlu0 %v420
  %v422 = vpop.xlane.xlu0 %421
  %v423 = vadd.f32 %v355, %v356
  %424 = vadd.xlane.f32.xlu0 %v423
  %v425 = vpop.xlane.xlu0 %424
  %v426 = vadd.f32 %v357, %v358
  %427 = vadd.xlane.f32.xlu0 %v426
  %v428 = vpop.xlane.xlu0 %427
  %v429 = vadd.f32 %v359, %v360
  %430 = vadd.xlane.f32.xlu0 %v429
  %v431 = vpop.xlane.xlu0 %430
  %v432 = vadd.f32 %v361, %v362
  %433 = vadd.xlane.f32.xlu0 %v432
  %v434 = vpop.xlane.xlu0 %433
  %v435 = vadd.f32 %v363, %v364
  %436 = vadd.xlane.f32.xlu0 %v435
  %v437 = vpop.xlane.xlu0 %436
  %v438 = vadd.f32 %v365, %v366
  %439 = vadd.xlane.f32.xlu0 %v438
  %v440 = vpop.xlane.xlu0 %439
  %v441 = vadd.f32 %v367, %v368
  %442 = vadd.xlane.f32.xlu0 %v441
  %v443 = vpop.xlane.xlu0 %442
  %v444 = vadd.f32 %v369, %v370
  %445 = vadd.xlane.f32.xlu0 %v444
  %v446 = vpop.xlane.xlu0 %445
  %v447 = vadd.f32 %v371, %v372
  %448 = vadd.xlane.f32.xlu0 %v447
  %v449 = vpop.xlane.xlu0 %448
  %v450 = vadd.f32 %v373, %v374
  %451 = vadd.xlane.f32.xlu0 %v450
  %v452 = vpop.xlane.xlu0 %451
  %v453 = vadd.f32 %v375, %v376
  %454 = vadd.xlane.f32.xlu0 %v453
  %v455 = vpop.xlane.xlu0 %454
  %v456 = vadd.f32 %v377, %v378
  %457 = vadd.xlane.f32.xlu0 %v456
  %v458 = vpop.xlane.xlu0 %457
  %v459 = vadd.f32 %v379, %v380
  %460 = vadd.xlane.f32.xlu0 %v459
  %v461 = vpop.xlane.xlu0 %460
  %v462 = vadd.f32 %v381, %v382
  %463 = vadd.xlane.f32.xlu0 %v462
  %v464 = vpop.xlane.xlu0 %463
  %v465 = vadd.f32 %v383, %v384
  %466 = vadd.xlane.f32.xlu0 %v465
  %v467 = vpop.xlane.xlu0 %466
  %v468 = vadd.f32 %v385, %v386
  %469 = vadd.xlane.f32.xlu0 %v468
  %v470 = vpop.xlane.xlu0 %469
  %v471 = vadd.f32 %v387, %v388
  %472 = vadd.xlane.f32.xlu0 %v471
  %v473 = vpop.xlane.xlu0 %472
  %v474 = vadd.f32 %v389, %v390
  %475 = vadd.xlane.f32.xlu0 %v474
  %v476 = vpop.xlane.xlu0 %475
  %v477 = vadd.f32 %v391, %v392
  %478 = vadd.xlane.f32.xlu0 %v477
  %v479 = vpop.xlane.xlu0 %478
  %v480 = vadd.f32 %v393, %v394
  %481 = vadd.xlane.f32.xlu0 %v480
  %v482 = vpop.xlane.xlu0 %481
  %v483 = vadd.f32 %v395, %v396
  %484 = vadd.xlane.f32.xlu0 %v483
  %v485 = vpop.xlane.xlu0 %484
  %v486 = vadd.f32 %v397, %v398
  %487 = vadd.xlane.f32.xlu0 %v486
  %v488 = vpop.xlane.xlu0 %487
  %v489 = vadd.f32 %v399, %v400
  %490 = vadd.xlane.f32.xlu0 %v489
  %v491 = vpop.xlane.xlu0 %490
  %v492 = vadd.f32 %v401, %v402
  %493 = vadd.xlane.f32.xlu0 %v492
  %v494 = vpop.xlane.xlu0 %493
  %v495 = vadd.f32 %v403, %v404
  %496 = vadd.xlane.f32.xlu0 %v495
  %v497 = vpop.xlane.xlu0 %496
  %v498 = vadd.f32 %v405, %v406
  %499 = vadd.xlane.f32.xlu0 %v498
  %v500 = vpop.xlane.xlu0 %499
  %v501 = vadd.f32 %v407, %v408
  %502 = vadd.xlane.f32.xlu0 %v501
  %v503 = vpop.xlane.xlu0 %502
  %v504 = vadd.f32 %v409, %v410
  %505 = vadd.xlane.f32.xlu0 %v504
  %v506 = vpop.xlane.xlu0 %505
  %v507 = vrcp.pop 256.0
  %v508 = vmul.f32 %v413, %v507
  %v509 = vmul.f32 %v416, %v507
  %v510 = vmul.f32 %v419, %v507
  %v511 = vmul.f32 %v422, %v507
  %v512 = vmul.f32 %v425, %v507
  %v513 = vmul.f32 %v428, %v507
  %v514 = vmul.f32 %v431, %v507
  %v515 = vmul.f32 %v434, %v507
  %v516 = vmul.f32 %v437, %v507
  %v517 = vmul.f32 %v440, %v507
  %v518 = vmul.f32 %v443, %v507
  %v519 = vmul.f32 %v446, %v507
  %v520 = vmul.f32 %v449, %v507
  %v521 = vmul.f32 %v452, %v507
  %v522 = vmul.f32 %v455, %v507
  %v523 = vmul.f32 %v458, %v507
  %v524 = vmul.f32 %v461, %v507
  %v525 = vmul.f32 %v464, %v507
  %v526 = vmul.f32 %v467, %v507
  %v527 = vmul.f32 %v470, %v507
  %v528 = vmul.f32 %v473, %v507
  %v529 = vmul.f32 %v476, %v507
  %v530 = vmul.f32 %v479, %v507
  %v531 = vmul.f32 %v482, %v507
  %v532 = vmul.f32 %v485, %v507
  %v533 = vmul.f32 %v488, %v507
  %v534 = vmul.f32 %v491, %v507
  %v535 = vmul.f32 %v494, %v507
  %v536 = vmul.f32 %v497, %v507
  %v537 = vmul.f32 %v500, %v507
  %v538 = vmul.f32 %v503, %v507
  %v539 = vmul.f32 %v506, %v507
  %v540 = vmul.f32 %v347, %v347
  %v541 = vmul.f32 %v348, %v348
  %v542 = vmul.f32 %v349, %v349
  %v543 = vmul.f32 %v350, %v350
  %v544 = vmul.f32 %v351, %v351
  %v545 = vmul.f32 %v352, %v352
  %v546 = vmul.f32 %v353, %v353
  %v547 = vmul.f32 %v354, %v354
  %v548 = vmul.f32 %v355, %v355
  %v549 = vmul.f32 %v356, %v356
  %v550 = vmul.f32 %v357, %v357
  %v551 = vmul.f32 %v358, %v358
  %v552 = vmul.f32 %v359, %v359
  %v553 = vmul.f32 %v360, %v360
  %v554 = vmul.f32 %v361, %v361
  %v555 = vmul.f32 %v362, %v362
  %v556 = vmul.f32 %v363, %v363
  %v557 = vmul.f32 %v364, %v364
  %v558 = vmul.f32 %v365, %v365
  %v559 = vmul.f32 %v366, %v366
  %v560 = vmul.f32 %v367, %v367
  %v561 = vmul.f32 %v368, %v368
  %v562 = vmul.f32 %v369, %v369
  %v563 = vmul.f32 %v370, %v370
  %v564 = vmul.f32 %v371, %v371
  %v565 = vmul.f32 %v372, %v372
  %v566 = vmul.f32 %v373, %v373
  %v567 = vmul.f32 %v374, %v374
  %v568 = vmul.f32 %v375, %v375
  %v569 = vmul.f32 %v376, %v376
  %v570 = vmul.f32 %v377, %v377
  %v571 = vmul.f32 %v378, %v378
  %v572 = vmul.f32 %v379, %v379
  %v573 = vmul.f32 %v380, %v380
  %v574 = vmul.f32 %v381, %v381
  %v575 = vmul.f32 %v382, %v382
  %v576 = vmul.f32 %v383, %v383
  %v577 = vmul.f32 %v384, %v384
  %v578 = vmul.f32 %v385, %v385
  %v579 = vmul.f32 %v386, %v386
  %v580 = vmul.f32 %v387, %v387
  %v581 = vmul.f32 %v388, %v388
  %v582 = vmul.f32 %v389, %v389
  %v583 = vmul.f32 %v390, %v390
  %v584 = vmul.f32 %v391, %v391
  %v585 = vmul.f32 %v392, %v392
  %v586 = vmul.f32 %v393, %v393
  %v587 = vmul.f32 %v394, %v394
  %v588 = vmul.f32 %v395, %v395
  %v589 = vmul.f32 %v396, %v396
  %v590 = vmul.f32 %v397, %v397
  %v591 = vmul.f32 %v398, %v398
  %v592 = vmul.f32 %v399, %v399
  %v593 = vmul.f32 %v400, %v400
  %v594 = vmul.f32 %v401, %v401
  %v595 = vmul.f32 %v402, %v402
  %v596 = vmul.f32 %v403, %v403
  %v597 = vmul.f32 %v404, %v404
  %v598 = vmul.f32 %v405, %v405
  %v599 = vmul.f32 %v406, %v406
  %v600 = vmul.f32 %v407, %v407
  %v601 = vmul.f32 %v408, %v408
  %v602 = vmul.f32 %v409, %v409
  %v603 = vmul.f32 %v410, %v410
  %v604 = vadd.f32 %v540, %v541
  %605 = vadd.xlane.f32.xlu0 %v604
  %v606 = vpop.xlane.xlu0 %605
  %v607 = vadd.f32 %v542, %v543
  %608 = vadd.xlane.f32.xlu0 %v607
  %v609 = vpop.xlane.xlu0 %608
  %v610 = vadd.f32 %v544, %v545
  %611 = vadd.xlane.f32.xlu0 %v610
  %v612 = vpop.xlane.xlu0 %611
  %v613 = vadd.f32 %v546, %v547
  %614 = vadd.xlane.f32.xlu0 %v613
  %v615 = vpop.xlane.xlu0 %614
  %v616 = vadd.f32 %v548, %v549
  %617 = vadd.xlane.f32.xlu0 %v616
  %v618 = vpop.xlane.xlu0 %617
  %v619 = vadd.f32 %v550, %v551
  %620 = vadd.xlane.f32.xlu0 %v619
  %v621 = vpop.xlane.xlu0 %620
  %v622 = vadd.f32 %v552, %v553
  %623 = vadd.xlane.f32.xlu0 %v622
  %v624 = vpop.xlane.xlu0 %623
  %v625 = vadd.f32 %v554, %v555
  %626 = vadd.xlane.f32.xlu0 %v625
  %v627 = vpop.xlane.xlu0 %626
  %v628 = vadd.f32 %v556, %v557
  %629 = vadd.xlane.f32.xlu0 %v628
  %v630 = vpop.xlane.xlu0 %629
  %v631 = vadd.f32 %v558, %v559
  %632 = vadd.xlane.f32.xlu0 %v631
  %v633 = vpop.xlane.xlu0 %632
  %v634 = vadd.f32 %v560, %v561
  %635 = vadd.xlane.f32.xlu0 %v634
  %v636 = vpop.xlane.xlu0 %635
  %v637 = vadd.f32 %v562, %v563
  %638 = vadd.xlane.f32.xlu0 %v637
  %v639 = vpop.xlane.xlu0 %638
  %v640 = vadd.f32 %v564, %v565
  %641 = vadd.xlane.f32.xlu0 %v640
  %v642 = vpop.xlane.xlu0 %641
  %v643 = vadd.f32 %v566, %v567
  %644 = vadd.xlane.f32.xlu0 %v643
  %v645 = vpop.xlane.xlu0 %644
  %v646 = vadd.f32 %v568, %v569
  %647 = vadd.xlane.f32.xlu0 %v646
  %v648 = vpop.xlane.xlu0 %647
  %v649 = vadd.f32 %v570, %v571
  %650 = vadd.xlane.f32.xlu0 %v649
  %v651 = vpop.xlane.xlu0 %650
  %v652 = vadd.f32 %v572, %v573
  %653 = vadd.xlane.f32.xlu0 %v652
  %v654 = vpop.xlane.xlu0 %653
  %v655 = vadd.f32 %v574, %v575
  %656 = vadd.xlane.f32.xlu0 %v655
  %v657 = vpop.xlane.xlu0 %656
  %v658 = vadd.f32 %v576, %v577
  %659 = vadd.xlane.f32.xlu0 %v658
  %v660 = vpop.xlane.xlu0 %659
  %v661 = vadd.f32 %v578, %v579
  %662 = vadd.xlane.f32.xlu0 %v661
  %v663 = vpop.xlane.xlu0 %662
  %v664 = vadd.f32 %v580, %v581
  %665 = vadd.xlane.f32.xlu0 %v664
  %v666 = vpop.xlane.xlu0 %665
  %v667 = vadd.f32 %v582, %v583
  %668 = vadd.xlane.f32.xlu0 %v667
  %v669 = vpop.xlane.xlu0 %668
  %v670 = vadd.f32 %v584, %v585
  %671 = vadd.xlane.f32.xlu0 %v670
  %v672 = vpop.xlane.xlu0 %671
  %v673 = vadd.f32 %v586, %v587
  %674 = vadd.xlane.f32.xlu0 %v673
  %v675 = vpop.xlane.xlu0 %674
  %v676 = vadd.f32 %v588, %v589
  %677 = vadd.xlane.f32.xlu0 %v676
  %v678 = vpop.xlane.xlu0 %677
  %v679 = vadd.f32 %v590, %v591
  %680 = vadd.xlane.f32.xlu0 %v679
  %v681 = vpop.xlane.xlu0 %680
  %v682 = vadd.f32 %v592, %v593
  %683 = vadd.xlane.f32.xlu0 %v682
  %v684 = vpop.xlane.xlu0 %683
  %v685 = vadd.f32 %v594, %v595
  %686 = vadd.xlane.f32.xlu0 %v685
  %v687 = vpop.xlane.xlu0 %686
  %v688 = vadd.f32 %v596, %v597
  %689 = vadd.xlane.f32.xlu0 %v688
  %v690 = vpop.xlane.xlu0 %689
  %v691 = vadd.f32 %v598, %v599
  %692 = vadd.xlane.f32.xlu0 %v691
  %v693 = vpop.xlane.xlu0 %692
  %v694 = vadd.f32 %v600, %v601
  %695 = vadd.xlane.f32.xlu0 %v694
  %v696 = vpop.xlane.xlu0 %695
  %v697 = vadd.f32 %v602, %v603
  %698 = vadd.xlane.f32.xlu0 %v697
  %v699 = vpop.xlane.xlu0 %698
  %v700 = vmul.f32 %v606, %v507
  %v701 = vmul.f32 %v609, %v507
  %v702 = vmul.f32 %v612, %v507
  %v703 = vmul.f32 %v615, %v507
  %v704 = vmul.f32 %v618, %v507
  %v705 = vmul.f32 %v621, %v507
  %v706 = vmul.f32 %v624, %v507
  %v707 = vmul.f32 %v627, %v507
  %v708 = vmul.f32 %v630, %v507
  %v709 = vmul.f32 %v633, %v507
  %v710 = vmul.f32 %v636, %v507
  %v711 = vmul.f32 %v639, %v507
  %v712 = vmul.f32 %v642, %v507
  %v713 = vmul.f32 %v645, %v507
  %v714 = vmul.f32 %v648, %v507
  %v715 = vmul.f32 %v651, %v507
  %v716 = vmul.f32 %v654, %v507
  %v717 = vmul.f32 %v657, %v507
  %v718 = vmul.f32 %v660, %v507
  %v719 = vmul.f32 %v663, %v507
  %v720 = vmul.f32 %v666, %v507
  %v721 = vmul.f32 %v669, %v507
  %v722 = vmul.f32 %v672, %v507
  %v723 = vmul.f32 %v675, %v507
  %v724 = vmul.f32 %v678, %v507
  %v725 = vmul.f32 %v681, %v507
  %v726 = vmul.f32 %v684, %v507
  %v727 = vmul.f32 %v687, %v507
  %v728 = vmul.f32 %v690, %v507
  %v729 = vmul.f32 %v693, %v507
  %v730 = vmul.f32 %v696, %v507
  %v731 = vmul.f32 %v699, %v507
  %v732 = vmul.f32 %v508, %v508
  %v733 = vmul.f32 %v509, %v509
  %v734 = vmul.f32 %v510, %v510
  %v735 = vmul.f32 %v511, %v511
  %v736 = vmul.f32 %v512, %v512
  %v737 = vmul.f32 %v513, %v513
  %v738 = vmul.f32 %v514, %v514
  %v739 = vmul.f32 %v515, %v515
  %v740 = vmul.f32 %v516, %v516
  %v741 = vmul.f32 %v517, %v517
  %v742 = vmul.f32 %v518, %v518
  %v743 = vmul.f32 %v519, %v519
  %v744 = vmul.f32 %v520, %v520
  %v745 = vmul.f32 %v521, %v521
  %v746 = vmul.f32 %v522, %v522
  %v747 = vmul.f32 %v523, %v523
  %v748 = vmul.f32 %v524, %v524
  %v749 = vmul.f32 %v525, %v525
  %v750 = vmul.f32 %v526, %v526
  %v751 = vmul.f32 %v527, %v527
  %v752 = vmul.f32 %v528, %v528
  %v753 = vmul.f32 %v529, %v529
  %v754 = vmul.f32 %v530, %v530
  %v755 = vmul.f32 %v531, %v531
  %v756 = vmul.f32 %v532, %v532
  %v757 = vmul.f32 %v533, %v533
  %v758 = vmul.f32 %v534, %v534
  %v759 = vmul.f32 %v535, %v535
  %v760 = vmul.f32 %v536, %v536
  %v761 = vmul.f32 %v537, %v537
  %v762 = vmul.f32 %v538, %v538
  %v763 = vmul.f32 %v539, %v539
  %v764 = vsub.f32 %v700, %v732
  %v765 = vsub.f32 %v701, %v733
  %v766 = vsub.f32 %v702, %v734
  %v767 = vsub.f32 %v703, %v735
  %v768 = vsub.f32 %v704, %v736
  %v769 = vsub.f32 %v705, %v737
  %v770 = vsub.f32 %v706, %v738
  %v771 = vsub.f32 %v707, %v739
  %v772 = vsub.f32 %v708, %v740
  %v773 = vsub.f32 %v709, %v741
  %v774 = vsub.f32 %v710, %v742
  %v775 = vsub.f32 %v711, %v743
  %v776 = vsub.f32 %v712, %v744
  %v777 = vsub.f32 %v713, %v745
  %v778 = vsub.f32 %v714, %v746
  %v779 = vsub.f32 %v715, %v747
  %v780 = vsub.f32 %v716, %v748
  %v781 = vsub.f32 %v717, %v749
  %v782 = vsub.f32 %v718, %v750
  %v783 = vsub.f32 %v719, %v751
  %v784 = vsub.f32 %v720, %v752
  %v785 = vsub.f32 %v721, %v753
  %v786 = vsub.f32 %v722, %v754
  %v787 = vsub.f32 %v723, %v755
  %v788 = vsub.f32 %v724, %v756
  %v789 = vsub.f32 %v725, %v757
  %v790 = vsub.f32 %v726, %v758
  %v791 = vsub.f32 %v727, %v759
  %v792 = vsub.f32 %v728, %v760
  %v793 = vsub.f32 %v729, %v761
  %v794 = vsub.f32 %v730, %v762
  %v795 = vsub.f32 %v731, %v763
  %v796 = vmax.f32 %v764, 0.0
  %v797 = vmax.f32 %v765, 0.0
  %v798 = vmax.f32 %v766, 0.0
  %v799 = vmax.f32 %v767, 0.0
  %v800 = vmax.f32 %v768, 0.0
  %v801 = vmax.f32 %v769, 0.0
  %v802 = vmax.f32 %v770, 0.0
  %v803 = vmax.f32 %v771, 0.0
  %v804 = vmax.f32 %v772, 0.0
  %v805 = vmax.f32 %v773, 0.0
  %v806 = vmax.f32 %v774, 0.0
  %v807 = vmax.f32 %v775, 0.0
  %v808 = vmax.f32 %v776, 0.0
  %v809 = vmax.f32 %v777, 0.0
  %v810 = vmax.f32 %v778, 0.0
  %v811 = vmax.f32 %v779, 0.0
  %v812 = vmax.f32 %v780, 0.0
  %v813 = vmax.f32 %v781, 0.0
  %v814 = vmax.f32 %v782, 0.0
  %v815 = vmax.f32 %v783, 0.0
  %v816 = vmax.f32 %v784, 0.0
  %v817 = vmax.f32 %v785, 0.0
  %v818 = vmax.f32 %v786, 0.0
  %v819 = vmax.f32 %v787, 0.0
  %v820 = vmax.f32 %v788, 0.0
  %v821 = vmax.f32 %v789, 0.0
  %v822 = vmax.f32 %v790, 0.0
  %v823 = vmax.f32 %v791, 0.0
  %v824 = vmax.f32 %v792, 0.0
  %v825 = vmax.f32 %v793, 0.0
  %v826 = vmax.f32 %v794, 0.0
  %v827 = vmax.f32 %v795, 0.0
  %v828 = vadd.f32 %v796, 1e-05
  %v829 = vadd.f32 %v797, 1e-05
  %v830 = vadd.f32 %v798, 1e-05
  %v831 = vadd.f32 %v799, 1e-05
  %v832 = vadd.f32 %v800, 1e-05
  %v833 = vadd.f32 %v801, 1e-05
  %v834 = vadd.f32 %v802, 1e-05
  %v835 = vadd.f32 %v803, 1e-05
  %v836 = vadd.f32 %v804, 1e-05
  %v837 = vadd.f32 %v805, 1e-05
  %v838 = vadd.f32 %v806, 1e-05
  %v839 = vadd.f32 %v807, 1e-05
  %v840 = vadd.f32 %v808, 1e-05
  %v841 = vadd.f32 %v809, 1e-05
  %v842 = vadd.f32 %v810, 1e-05
  %v843 = vadd.f32 %v811, 1e-05
  %v844 = vadd.f32 %v812, 1e-05
  %v845 = vadd.f32 %v813, 1e-05
  %v846 = vadd.f32 %v814, 1e-05
  %v847 = vadd.f32 %v815, 1e-05
  %v848 = vadd.f32 %v816, 1e-05
  %v849 = vadd.f32 %v817, 1e-05
  %v850 = vadd.f32 %v818, 1e-05
  %v851 = vadd.f32 %v819, 1e-05
  %v852 = vadd.f32 %v820, 1e-05
  %v853 = vadd.f32 %v821, 1e-05
  %v854 = vadd.f32 %v822, 1e-05
  %v855 = vadd.f32 %v823, 1e-05
  %v856 = vadd.f32 %v824, 1e-05
  %v857 = vadd.f32 %v825, 1e-05
  %v858 = vadd.f32 %v826, 1e-05
  %v859 = vadd.f32 %v827, 1e-05
  %v860 = vrsqrt.pop %v828
  %v861 = vrsqrt.pop %v829
  %v862 = vrsqrt.pop %v830
  %v863 = vrsqrt.pop %v831
  %v864 = vrsqrt.pop %v832
  %v865 = vrsqrt.pop %v833
  %v866 = vrsqrt.pop %v834
  %v867 = vrsqrt.pop %v835
  %v868 = vrsqrt.pop %v836
  %v869 = vrsqrt.pop %v837
  %v870 = vrsqrt.pop %v838
  %v871 = vrsqrt.pop %v839
  %v872 = vrsqrt.pop %v840
  %v873 = vrsqrt.pop %v841
  %v874 = vrsqrt.pop %v842
  %v875 = vrsqrt.pop %v843
  %v876 = vrsqrt.pop %v844
  %v877 = vrsqrt.pop %v845
  %v878 = vrsqrt.pop %v846
  %v879 = vrsqrt.pop %v847
  %v880 = vrsqrt.pop %v848
  %v881 = vrsqrt.pop %v849
  %v882 = vrsqrt.pop %v850
  %v883 = vrsqrt.pop %v851
  %v884 = vrsqrt.pop %v852
  %v885 = vrsqrt.pop %v853
  %v886 = vrsqrt.pop %v854
  %v887 = vrsqrt.pop %v855
  %v888 = vrsqrt.pop %v856
  %v889 = vrsqrt.pop %v857
  %v890 = vrsqrt.pop %v858
  %v891 = vrsqrt.pop %v859
  %v892 = vld [vmem:[%s3] sm:$0x3]
  %v894 = vlaneseq
  %v895 = vshrl.u32 %v894, 7
  %v896 = vsub.s32 0, %v895
  %v897 = vrot.slane %v892, %v896
  %v898 = vlaneseq
  %v899 = vshrl.u32 %v898, 7
  %v900 = vsub.s32 1, %v899
  %v901 = vrot.slane %v892, %v900
  %v904 = vmul.f32 %v897, %v860
  %v905 = vmul.f32 %v901, %v860
  %v906 = vmul.f32 %v897, %v861
  %v907 = vmul.f32 %v901, %v861
  %v908 = vmul.f32 %v897, %v862
  %v909 = vmul.f32 %v901, %v862
  %v910 = vmul.f32 %v897, %v863
  %v911 = vmul.f32 %v901, %v863
  %v912 = vmul.f32 %v897, %v864
  %v913 = vmul.f32 %v901, %v864
  %v914 = vmul.f32 %v897, %v865
  %v915 = vmul.f32 %v901, %v865
  %v916 = vmul.f32 %v897, %v866
  %v917 = vmul.f32 %v901, %v866
  %v918 = vmul.f32 %v897, %v867
  %v919 = vmul.f32 %v901, %v867
  %v920 = vmul.f32 %v897, %v868
  %v921 = vmul.f32 %v901, %v868
  %v922 = vmul.f32 %v897, %v869
  %v923 = vmul.f32 %v901, %v869
  %v924 = vmul.f32 %v897, %v870
  %v925 = vmul.f32 %v901, %v870
  %v926 = vmul.f32 %v897, %v871
  %v927 = vmul.f32 %v901, %v871
  %v928 = vmul.f32 %v897, %v872
  %v929 = vmul.f32 %v901, %v872
  %v930 = vmul.f32 %v897, %v873
  %v931 = vmul.f32 %v901, %v873
  %v932 = vmul.f32 %v897, %v874
  %v933 = vmul.f32 %v901, %v874
  %v934 = vmul.f32 %v897, %v875
  %v935 = vmul.f32 %v901, %v875
  %v936 = vmul.f32 %v897, %v876
  %v937 = vmul.f32 %v901, %v876
  %v938 = vmul.f32 %v897, %v877
  %v939 = vmul.f32 %v901, %v877
  %v940 = vmul.f32 %v897, %v878
  %v941 = vmul.f32 %v901, %v878
  %v942 = vmul.f32 %v897, %v879
  %v943 = vmul.f32 %v901, %v879
  %v944 = vmul.f32 %v897, %v880
  %v945 = vmul.f32 %v901, %v880
  %v946 = vmul.f32 %v897, %v881
  %v947 = vmul.f32 %v901, %v881
  %v948 = vmul.f32 %v897, %v882
  %v949 = vmul.f32 %v901, %v882
  %v950 = vmul.f32 %v897, %v883
  %v951 = vmul.f32 %v901, %v883
  %v952 = vmul.f32 %v897, %v884
  %v953 = vmul.f32 %v901, %v884
  %v954 = vmul.f32 %v897, %v885
  %v955 = vmul.f32 %v901, %v885
  %v956 = vmul.f32 %v897, %v886
  %v957 = vmul.f32 %v901, %v886
  %v958 = vmul.f32 %v897, %v887
  %v959 = vmul.f32 %v901, %v887
  %v960 = vmul.f32 %v897, %v888
  %v961 = vmul.f32 %v901, %v888
  %v962 = vmul.f32 %v897, %v889
  %v963 = vmul.f32 %v901, %v889
  %v964 = vmul.f32 %v897, %v890
  %v965 = vmul.f32 %v901, %v890
  %v966 = vmul.f32 %v897, %v891
  %v967 = vmul.f32 %v901, %v891
  %v968 = vsub.f32 %v347, %v508
  %v969 = vsub.f32 %v348, %v508
  %v970 = vsub.f32 %v349, %v509
  %v971 = vsub.f32 %v350, %v509
  %v972 = vsub.f32 %v351, %v510
  %v973 = vsub.f32 %v352, %v510
  %v974 = vsub.f32 %v353, %v511
  %v975 = vsub.f32 %v354, %v511
  %v976 = vsub.f32 %v355, %v512
  %v977 = vsub.f32 %v356, %v512
  %v978 = vsub.f32 %v357, %v513
  %v979 = vsub.f32 %v358, %v513
  %v980 = vsub.f32 %v359, %v514
  %v981 = vsub.f32 %v360, %v514
  %v982 = vsub.f32 %v361, %v515
  %v983 = vsub.f32 %v362, %v515
  %v984 = vsub.f32 %v363, %v516
  %v985 = vsub.f32 %v364, %v516
  %v986 = vsub.f32 %v365, %v517
  %v987 = vsub.f32 %v366, %v517
  %v988 = vsub.f32 %v367, %v518
  %v989 = vsub.f32 %v368, %v518
  %v990 = vsub.f32 %v369, %v519
  %v991 = vsub.f32 %v370, %v519
  %v992 = vsub.f32 %v371, %v520
  %v993 = vsub.f32 %v372, %v520
  %v994 = vsub.f32 %v373, %v521
  %v995 = vsub.f32 %v374, %v521
  %v996 = vsub.f32 %v375, %v522
  %v997 = vsub.f32 %v376, %v522
  %v998 = vsub.f32 %v377, %v523
  %v999 = vsub.f32 %v378, %v523
  %v1000 = vsub.f32 %v379, %v524
  %v1001 = vsub.f32 %v380, %v524
  %v1002 = vsub.f32 %v381, %v525
  %v1003 = vsub.f32 %v382, %v525
  %v1004 = vsub.f32 %v383, %v526
  %v1005 = vsub.f32 %v384, %v526
  %v1006 = vsub.f32 %v385, %v527
  %v1007 = vsub.f32 %v386, %v527
  %v1008 = vsub.f32 %v387, %v528
  %v1009 = vsub.f32 %v388, %v528
  %v1010 = vsub.f32 %v389, %v529
  %v1011 = vsub.f32 %v390, %v529
  %v1012 = vsub.f32 %v391, %v530
  %v1013 = vsub.f32 %v392, %v530
  %v1014 = vsub.f32 %v393, %v531
  %v1015 = vsub.f32 %v394, %v531
  %v1016 = vsub.f32 %v395, %v532
  %v1017 = vsub.f32 %v396, %v532
  %v1018 = vsub.f32 %v397, %v533
  %v1019 = vsub.f32 %v398, %v533
  %v1020 = vsub.f32 %v399, %v534
  %v1021 = vsub.f32 %v400, %v534
  %v1022 = vsub.f32 %v401, %v535
  %v1023 = vsub.f32 %v402, %v535
  %v1024 = vsub.f32 %v403, %v536
  %v1025 = vsub.f32 %v404, %v536
  %v1026 = vsub.f32 %v405, %v537
  %v1027 = vsub.f32 %v406, %v537
  %v1028 = vsub.f32 %v407, %v538
  %v1029 = vsub.f32 %v408, %v538
  %v1030 = vsub.f32 %v409, %v539
  %v1031 = vsub.f32 %v410, %v539
  %v1032 = vmul.f32 %v968, %v904
  %v1033 = vmul.f32 %v969, %v905
  %v1034 = vmul.f32 %v970, %v906
  %v1035 = vmul.f32 %v971, %v907
  %v1036 = vmul.f32 %v972, %v908
  %v1037 = vmul.f32 %v973, %v909
  %v1038 = vmul.f32 %v974, %v910
  %v1039 = vmul.f32 %v975, %v911
  %v1040 = vmul.f32 %v976, %v912
  %v1041 = vmul.f32 %v977, %v913
  %v1042 = vmul.f32 %v978, %v914
  %v1043 = vmul.f32 %v979, %v915
  %v1044 = vmul.f32 %v980, %v916
  %v1045 = vmul.f32 %v981, %v917
  %v1046 = vmul.f32 %v982, %v918
  %v1047 = vmul.f32 %v983, %v919
  %v1048 = vmul.f32 %v984, %v920
  %v1049 = vmul.f32 %v985, %v921
  %v1050 = vmul.f32 %v986, %v922
  %v1051 = vmul.f32 %v987, %v923
  %v1052 = vmul.f32 %v988, %v924
  %v1053 = vmul.f32 %v989, %v925
  %v1054 = vmul.f32 %v990, %v926
  %v1055 = vmul.f32 %v991, %v927
  %v1056 = vmul.f32 %v992, %v928
  %v1057 = vmul.f32 %v993, %v929
  %v1058 = vmul.f32 %v994, %v930
  %v1059 = vmul.f32 %v995, %v931
  %v1060 = vmul.f32 %v996, %v932
  %v1061 = vmul.f32 %v997, %v933
  %v1062 = vmul.f32 %v998, %v934
  %v1063 = vmul.f32 %v999, %v935
  %v1064 = vmul.f32 %v1000, %v936
  %v1065 = vmul.f32 %v1001, %v937
  %v1066 = vmul.f32 %v1002, %v938
  %v1067 = vmul.f32 %v1003, %v939
  %v1068 = vmul.f32 %v1004, %v940
  %v1069 = vmul.f32 %v1005, %v941
  %v1070 = vmul.f32 %v1006, %v942
  %v1071 = vmul.f32 %v1007, %v943
  %v1072 = vmul.f32 %v1008, %v944
  %v1073 = vmul.f32 %v1009, %v945
  %v1074 = vmul.f32 %v1010, %v946
  %v1075 = vmul.f32 %v1011, %v947
  %v1076 = vmul.f32 %v1012, %v948
  %v1077 = vmul.f32 %v1013, %v949
  %v1078 = vmul.f32 %v1014, %v950
  %v1079 = vmul.f32 %v1015, %v951
  %v1080 = vmul.f32 %v1016, %v952
  %v1081 = vmul.f32 %v1017, %v953
  %v1082 = vmul.f32 %v1018, %v954
  %v1083 = vmul.f32 %v1019, %v955
  %v1084 = vmul.f32 %v1020, %v956
  %v1085 = vmul.f32 %v1021, %v957
  %v1086 = vmul.f32 %v1022, %v958
  %v1087 = vmul.f32 %v1023, %v959
  %v1088 = vmul.f32 %v1024, %v960
  %v1089 = vmul.f32 %v1025, %v961
  %v1090 = vmul.f32 %v1026, %v962
  %v1091 = vmul.f32 %v1027, %v963
  %v1092 = vmul.f32 %v1028, %v964
  %v1093 = vmul.f32 %v1029, %v965
  %v1094 = vmul.f32 %v1030, %v966
  %v1095 = vmul.f32 %v1031, %v967
  %v1096 = vld [vmem:[%s4] sm:$0x3]
  %v1098 = vlaneseq
  %v1099 = vshrl.u32 %v1098, 7
  %v1100 = vsub.s32 0, %v1099
  %v1101 = vrot.slane %v1096, %v1100
  %v1102 = vlaneseq
  %v1103 = vshrl.u32 %v1102, 7
  %v1104 = vsub.s32 1, %v1103
  %v1105 = vrot.slane %v1096, %v1104
  %v1108 = vadd.f32 %v1032, %v1101
  %v1109 = vadd.f32 %v1033, %v1105
  %v1110 = vadd.f32 %v1034, %v1101
  %v1111 = vadd.f32 %v1035, %v1105
  %v1112 = vadd.f32 %v1036, %v1101
  %v1113 = vadd.f32 %v1037, %v1105
  %v1114 = vadd.f32 %v1038, %v1101
  %v1115 = vadd.f32 %v1039, %v1105
  %v1116 = vadd.f32 %v1040, %v1101
  %v1117 = vadd.f32 %v1041, %v1105
  %v1118 = vadd.f32 %v1042, %v1101
  %v1119 = vadd.f32 %v1043, %v1105
  %v1120 = vadd.f32 %v1044, %v1101
  %v1121 = vadd.f32 %v1045, %v1105
  %v1122 = vadd.f32 %v1046, %v1101
  %v1123 = vadd.f32 %v1047, %v1105
  %v1124 = vadd.f32 %v1048, %v1101
  %v1125 = vadd.f32 %v1049, %v1105
  %v1126 = vadd.f32 %v1050, %v1101
  %v1127 = vadd.f32 %v1051, %v1105
  %v1128 = vadd.f32 %v1052, %v1101
  %v1129 = vadd.f32 %v1053, %v1105
  %v1130 = vadd.f32 %v1054, %v1101
  %v1131 = vadd.f32 %v1055, %v1105
  %v1132 = vadd.f32 %v1056, %v1101
  %v1133 = vadd.f32 %v1057, %v1105
  %v1134 = vadd.f32 %v1058, %v1101
  %v1135 = vadd.f32 %v1059, %v1105
  %v1136 = vadd.f32 %v1060, %v1101
  %v1137 = vadd.f32 %v1061, %v1105
  %v1138 = vadd.f32 %v1062, %v1101
  %v1139 = vadd.f32 %v1063, %v1105
  %v1140 = vadd.f32 %v1064, %v1101
  %v1141 = vadd.f32 %v1065, %v1105
  %v1142 = vadd.f32 %v1066, %v1101
  %v1143 = vadd.f32 %v1067, %v1105
  %v1144 = vadd.f32 %v1068, %v1101
  %v1145 = vadd.f32 %v1069, %v1105
  %v1146 = vadd.f32 %v1070, %v1101
  %v1147 = vadd.f32 %v1071, %v1105
  %v1148 = vadd.f32 %v1072, %v1101
  %v1149 = vadd.f32 %v1073, %v1105
  %v1150 = vadd.f32 %v1074, %v1101
  %v1151 = vadd.f32 %v1075, %v1105
  %v1152 = vadd.f32 %v1076, %v1101
  %v1153 = vadd.f32 %v1077, %v1105
  %v1154 = vadd.f32 %v1078, %v1101
  %v1155 = vadd.f32 %v1079, %v1105
  %v1156 = vadd.f32 %v1080, %v1101
  %v1157 = vadd.f32 %v1081, %v1105
  %v1158 = vadd.f32 %v1082, %v1101
  %v1159 = vadd.f32 %v1083, %v1105
  %v1160 = vadd.f32 %v1084, %v1101
  %v1161 = vadd.f32 %v1085, %v1105
  %v1162 = vadd.f32 %v1086, %v1101
  %v1163 = vadd.f32 %v1087, %v1105
  %v1164 = vadd.f32 %v1088, %v1101
  %v1165 = vadd.f32 %v1089, %v1105
  %v1166 = vadd.f32 %v1090, %v1101
  %v1167 = vadd.f32 %v1091, %v1105
  %v1168 = vadd.f32 %v1092, %v1101
  %v1169 = vadd.f32 %v1093, %v1105
  %v1170 = vadd.f32 %v1094, %v1101
  %v1171 = vadd.f32 %v1095, %v1105
  %v1172 = vpack.c.bf16 %v1110, %v1108
  %v1173 = vpack.c.bf16 %v1111, %v1109
  %v1174 = vpack.c.bf16 %v1114, %v1112
  %v1175 = vpack.c.bf16 %v1115, %v1113
  %v1176 = vpack.c.bf16 %v1118, %v1116
  %v1177 = vpack.c.bf16 %v1119, %v1117
  %v1178 = vpack.c.bf16 %v1122, %v1120
  %v1179 = vpack.c.bf16 %v1123, %v1121
  %v1180 = vpack.c.bf16 %v1126, %v1124
  %v1181 = vpack.c.bf16 %v1127, %v1125
  %v1182 = vpack.c.bf16 %v1130, %v1128
  %v1183 = vpack.c.bf16 %v1131, %v1129
  %v1184 = vpack.c.bf16 %v1134, %v1132
  %v1185 = vpack.c.bf16 %v1135, %v1133
  %v1186 = vpack.c.bf16 %v1138, %v1136
  %v1187 = vpack.c.bf16 %v1139, %v1137
  %v1188 = vpack.c.bf16 %v1142, %v1140
  %v1189 = vpack.c.bf16 %v1143, %v1141
  %v1190 = vpack.c.bf16 %v1146, %v1144
  %v1191 = vpack.c.bf16 %v1147, %v1145
  %v1192 = vpack.c.bf16 %v1150, %v1148
  %v1193 = vpack.c.bf16 %v1151, %v1149
  %v1194 = vpack.c.bf16 %v1154, %v1152
  %v1195 = vpack.c.bf16 %v1155, %v1153
  %v1196 = vpack.c.bf16 %v1158, %v1156
  %v1197 = vpack.c.bf16 %v1159, %v1157
  %v1198 = vpack.c.bf16 %v1162, %v1160
  %v1199 = vpack.c.bf16 %v1163, %v1161
  %v1200 = vpack.c.bf16 %v1166, %v1164
  %v1201 = vpack.c.bf16 %v1167, %v1165
  %v1202 = vpack.c.bf16 %v1170, %v1168
  %v1203 = vpack.c.bf16 %v1171, %v1169
  %v1204 = vld [vmem:[%s5] sm:$0xff]
  %v1205 = vld [vmem:[%s5 + $0x8] sm:$0xff]
  %v1206 = vld [vmem:[%s5 + $0x10] sm:$0xff]
  %v1207 = vld [vmem:[%s5 + $0x18] sm:$0xff]
  %v1208 = vld [vmem:[%s5 + $0x20] sm:$0xff]
  %v1209 = vld [vmem:[%s5 + $0x28] sm:$0xff]
  %v1210 = vld [vmem:[%s5 + $0x30] sm:$0xff]
  %v1211 = vld [vmem:[%s5 + $0x38] sm:$0xff]
  %v1212 = vld [vmem:[%s5 + $0x40] sm:$0xff]
  %v1213 = vld [vmem:[%s5 + $0x48] sm:$0xff]
  %v1214 = vld [vmem:[%s5 + $0x50] sm:$0xff]
  %v1215 = vld [vmem:[%s5 + $0x58] sm:$0xff]
  %v1216 = vld [vmem:[%s5 + $0x60] sm:$0xff]
  %v1217 = vld [vmem:[%s5 + $0x68] sm:$0xff]
  %v1218 = vld [vmem:[%s5 + $0x70] sm:$0xff]
  %v1219 = vld [vmem:[%s5 + $0x78] sm:$0xff]
  %v1220 = vld [vmem:[%s5 + $0x80] sm:$0xff]
  %v1221 = vld [vmem:[%s5 + $0x88] sm:$0xff]
  %v1222 = vld [vmem:[%s5 + $0x90] sm:$0xff]
  %v1223 = vld [vmem:[%s5 + $0x98] sm:$0xff]
  %v1224 = vld [vmem:[%s5 + $0xa0] sm:$0xff]
  %v1225 = vld [vmem:[%s5 + $0xa8] sm:$0xff]
  %v1226 = vld [vmem:[%s5 + $0xb0] sm:$0xff]
  %v1227 = vld [vmem:[%s5 + $0xb8] sm:$0xff]
  %v1228 = vld [vmem:[%s5 + $0xc0] sm:$0xff]
  %v1229 = vld [vmem:[%s5 + $0xc8] sm:$0xff]
  %v1230 = vld [vmem:[%s5 + $0xd0] sm:$0xff]
  %v1231 = vld [vmem:[%s5 + $0xd8] sm:$0xff]
  %v1232 = vld [vmem:[%s5 + $0xe0] sm:$0xff]
  %v1233 = vld [vmem:[%s5 + $0xe8] sm:$0xff]
  %v1234 = vld [vmem:[%s5 + $0xf0] sm:$0xff]
  %v1235 = vld [vmem:[%s5 + $0xf8] sm:$0xff]
  %v1236 = vld [vmem:[%s6] sm:$0x3]
  %v1238 = vlaneseq
  %v1239 = vshrl.u32 %v1238, 7
  %v1240 = vsub.s32 0, %v1239
  %v1241 = vrot.slane %v1236, %v1240
  %v1242 = vlaneseq
  %v1243 = vshrl.u32 %v1242, 7
  %v1244 = vsub.s32 1, %v1243
  %v1245 = vrot.slane %v1236, %v1244
  %v1280 = vunpack.c.l.b16 %v1204
  %v1281 = vunpack.c.h.b16 %v1204
  %v1282 = vunpack.c.l.b16 %v1205
  %v1283 = vunpack.c.h.b16 %v1205
  %v1284 = vunpack.c.l.b16 %v1206
  %v1285 = vunpack.c.h.b16 %v1206
  %v1286 = vunpack.c.l.b16 %v1207
  %v1287 = vunpack.c.h.b16 %v1207
  %v1288 = vunpack.c.l.b16 %v1208
  %v1289 = vunpack.c.h.b16 %v1208
  %v1290 = vunpack.c.l.b16 %v1209
  %v1291 = vunpack.c.h.b16 %v1209
  %v1292 = vunpack.c.l.b16 %v1210
  %v1293 = vunpack.c.h.b16 %v1210
  %v1294 = vunpack.c.l.b16 %v1211
  %v1295 = vunpack.c.h.b16 %v1211
  %v1296 = vunpack.c.l.b16 %v1212
  %v1297 = vunpack.c.h.b16 %v1212
  %v1298 = vunpack.c.l.b16 %v1213
  %v1299 = vunpack.c.h.b16 %v1213
  %v1300 = vunpack.c.l.b16 %v1214
  %v1301 = vunpack.c.h.b16 %v1214
  %v1302 = vunpack.c.l.b16 %v1215
  %v1303 = vunpack.c.h.b16 %v1215
  %v1304 = vunpack.c.l.b16 %v1216
  %v1305 = vunpack.c.h.b16 %v1216
  %v1306 = vunpack.c.l.b16 %v1217
  %v1307 = vunpack.c.h.b16 %v1217
  %v1308 = vunpack.c.l.b16 %v1218
  %v1309 = vunpack.c.h.b16 %v1218
  %v1310 = vunpack.c.l.b16 %v1219
  %v1311 = vunpack.c.h.b16 %v1219
  %v1312 = vunpack.c.l.b16 %v1220
  %v1313 = vunpack.c.h.b16 %v1220
  %v1314 = vunpack.c.l.b16 %v1221
  %v1315 = vunpack.c.h.b16 %v1221
  %v1316 = vunpack.c.l.b16 %v1222
  %v1317 = vunpack.c.h.b16 %v1222
  %v1318 = vunpack.c.l.b16 %v1223
  %v1319 = vunpack.c.h.b16 %v1223
  %v1320 = vunpack.c.l.b16 %v1224
  %v1321 = vunpack.c.h.b16 %v1224
  %v1322 = vunpack.c.l.b16 %v1225
  %v1323 = vunpack.c.h.b16 %v1225
  %v1324 = vunpack.c.l.b16 %v1226
  %v1325 = vunpack.c.h.b16 %v1226
  %v1326 = vunpack.c.l.b16 %v1227
  %v1327 = vunpack.c.h.b16 %v1227
  %v1328 = vunpack.c.l.b16 %v1228
  %v1329 = vunpack.c.h.b16 %v1228
  %v1330 = vunpack.c.l.b16 %v1229
  %v1331 = vunpack.c.h.b16 %v1229
  %v1332 = vunpack.c.l.b16 %v1230
  %v1333 = vunpack.c.h.b16 %v1230
  %v1334 = vunpack.c.l.b16 %v1231
  %v1335 = vunpack.c.h.b16 %v1231
  %v1336 = vunpack.c.l.b16 %v1232
  %v1337 = vunpack.c.h.b16 %v1232
  %v1338 = vunpack.c.l.b16 %v1233
  %v1339 = vunpack.c.h.b16 %v1233
  %v1340 = vunpack.c.l.b16 %v1234
  %v1341 = vunpack.c.h.b16 %v1234
  %v1342 = vunpack.c.l.b16 %v1235
  %v1343 = vunpack.c.h.b16 %v1235
  %v1344 = vpack.c.b16 %v1282, %v1280
  %v1345 = vpack.c.b16 %v1283, %v1281
  %v1346 = vpack.c.b16 %v1286, %v1284
  %v1347 = vpack.c.b16 %v1287, %v1285
  %v1348 = vpack.c.b16 %v1290, %v1288
  %v1349 = vpack.c.b16 %v1291, %v1289
  %v1350 = vpack.c.b16 %v1294, %v1292
  %v1351 = vpack.c.b16 %v1295, %v1293
  %v1352 = vpack.c.b16 %v1298, %v1296
  %v1353 = vpack.c.b16 %v1299, %v1297
  %v1354 = vpack.c.b16 %v1302, %v1300
  %v1355 = vpack.c.b16 %v1303, %v1301
  %v1356 = vpack.c.b16 %v1306, %v1304
  %v1357 = vpack.c.b16 %v1307, %v1305
  %v1358 = vpack.c.b16 %v1310, %v1308
  %v1359 = vpack.c.b16 %v1311, %v1309
  %v1360 = vpack.c.b16 %v1314, %v1312
  %v1361 = vpack.c.b16 %v1315, %v1313
  %v1362 = vpack.c.b16 %v1318, %v1316
  %v1363 = vpack.c.b16 %v1319, %v1317
  %v1364 = vpack.c.b16 %v1322, %v1320
  %v1365 = vpack.c.b16 %v1323, %v1321
  %v1366 = vpack.c.b16 %v1326, %v1324
  %v1367 = vpack.c.b16 %v1327, %v1325
  %v1368 = vpack.c.b16 %v1330, %v1328
  %v1369 = vpack.c.b16 %v1331, %v1329
  %v1370 = vpack.c.b16 %v1334, %v1332
  %v1371 = vpack.c.b16 %v1335, %v1333
  %v1372 = vpack.c.b16 %v1338, %v1336
  %v1373 = vpack.c.b16 %v1339, %v1337
  %v1374 = vpack.c.b16 %v1342, %v1340
  %v1375 = vpack.c.b16 %v1343, %v1341
  %1408 = vmatprep.subr.bf16.mxu0 %v1345
  %1409 = vmatpush1.bf16.msra.mxu0 %v1344
  %1410 = vmatprep.subr.bf16.mxu0 %v1347
  %1411 = vmatpush1.bf16.msra.mxu0 %v1346
  %1412 = vmatprep.subr.bf16.mxu0 %v1349
  %1413 = vmatpush1.bf16.msra.mxu0 %v1348
  %1414 = vmatprep.subr.bf16.mxu0 %v1351
  %1415 = vmatpush1.bf16.msra.mxu0 %v1350
  %1416 = vmatprep.subr.bf16.mxu0 %v1353
  %1417 = vmatpush1.bf16.msra.mxu0 %v1352
  %1418 = vmatprep.subr.bf16.mxu0 %v1355
  %1419 = vmatpush1.bf16.msra.mxu0 %v1354
  %1420 = vmatprep.subr.bf16.mxu0 %v1357
  %1421 = vmatpush1.bf16.msra.mxu0 %v1356
  %1422 = vmatprep.subr.bf16.mxu0 %v1359
  %1423 = vmatpush1.bf16.msra.mxu0 %v1358
  %1424 = vmatprep.subr.bf16.mxu0 %v1361
  %1425 = vmatpush1.bf16.msra.mxu0 %v1360
  %1426 = vmatprep.subr.bf16.mxu0 %v1363
  %1427 = vmatpush1.bf16.msra.mxu0 %v1362
  %1428 = vmatprep.subr.bf16.mxu0 %v1365
  %1429 = vmatpush1.bf16.msra.mxu0 %v1364
  %1430 = vmatprep.subr.bf16.mxu0 %v1367
  %1431 = vmatpush1.bf16.msra.mxu0 %v1366
  %1432 = vmatprep.subr.bf16.mxu0 %v1369
  %1433 = vmatpush1.bf16.msra.mxu0 %v1368
  %1434 = vmatprep.subr.bf16.mxu0 %v1371
  %1435 = vmatpush1.bf16.msra.mxu0 %v1370
  %1436 = vmatprep.subr.bf16.mxu0 %v1373
  %1437 = vmatpush1.bf16.msra.mxu0 %v1372
  %1438 = vmatprep.subr.bf16.mxu0 %v1375
  %1439 = vmatpush1.bf16.msra.mxu0 %v1374
  %1440 = vmatprep.mubr.bf16.mxu0 %v1173
  %1441 = vmatmul.mubr.bf16.gmra.mrb[0].mxu0 %v1172
  %v1442 = vpop.f32.mrb[0].mxu0
  %v1443 = vadd.f32 %v1241, %v1442
  %v1444 = vpop.f32.mrb[0].mxu0
  %v1445 = vadd.f32 %v1245, %v1444
  %v1446 = vpop.f32.mrb[0].mxu0
  %v1447 = vadd.f32 %v1241, %v1446
  %v1448 = vpop.f32.mrb[0].mxu0
  %v1449 = vadd.f32 %v1245, %v1448
  %1450 = vmatprep.mubr.bf16.mxu0 %v1175
  %1451 = vmatmul.mubr.bf16.gmra.mrb[0].mxu0 %v1174
  %v1452 = vpop.f32.mrb[0].mxu0
  %v1453 = vadd.f32 %v1241, %v1452
  %v1454 = vpop.f32.mrb[0].mxu0
  %v1455 = vadd.f32 %v1245, %v1454
  %v1456 = vpop.f32.mrb[0].mxu0
  %v1457 = vadd.f32 %v1241, %v1456
  %v1458 = vpop.f32.mrb[0].mxu0
  %v1459 = vadd.f32 %v1245, %v1458
  %1460 = vmatprep.mubr.bf16.mxu0 %v1177
  %1461 = vmatmul.mubr.bf16.gmra.mrb[0].mxu0 %v1176
  %v1462 = vpop.f32.mrb[0].mxu0
  %v1463 = vadd.f32 %v1241, %v1462
  %v1464 = vpop.f32.mrb[0].mxu0
  %v1465 = vadd.f32 %v1245, %v1464
  %v1466 = vpop.f32.mrb[0].mxu0
  %v1467 = vadd.f32 %v1241, %v1466
  %v1468 = vpop.f32.mrb[0].mxu0
  %v1469 = vadd.f32 %v1245, %v1468
  %1470 = vmatprep.mubr.bf16.mxu0 %v1179
  %1471 = vmatmul.mubr.bf16.gmra.mrb[0].mxu0 %v1178
  %v1472 = vpop.f32.mrb[0].mxu0
  %v1473 = vadd.f32 %v1241, %v1472
  %v1474 = vpop.f32.mrb[0].mxu0
  %v1475 = vadd.f32 %v1245, %v1474
  %v1476 = vpop.f32.mrb[0].mxu0
  %v1477 = vadd.f32 %v1241, %v1476
  %v1478 = vpop.f32.mrb[0].mxu0
  %v1479 = vadd.f32 %v1245, %v1478
  %1480 = vmatprep.mubr.bf16.mxu0 %v1181
  %1481 = vmatmul.mubr.bf16.gmra.mrb[0].mxu0 %v1180
  %v1482 = vpop.f32.mrb[0].mxu0
  %v1483 = vadd.f32 %v1241, %v1482
  %v1484 = vpop.f32.mrb[0].mxu0
  %v1485 = vadd.f32 %v1245, %v1484
  %v1486 = vpop.f32.mrb[0].mxu0
  %v1487 = vadd.f32 %v1241, %v1486
  %v1488 = vpop.f32.mrb[0].mxu0
  %v1489 = vadd.f32 %v1245, %v1488
  %1490 = vmatprep.mubr.bf16.mxu0 %v1183
  %1491 = vmatmul.mubr.bf16.gmra.mrb[0].mxu0 %v1182
  %v1492 = vpop.f32.mrb[0].mxu0
  %v1493 = vadd.f32 %v1241, %v1492
  %v1494 = vpop.f32.mrb[0].mxu0
  %v1495 = vadd.f32 %v1245, %v1494
  %v1496 = vpop.f32.mrb[0].mxu0
  %v1497 = vadd.f32 %v1241, %v1496
  %v1498 = vpop.f32.mrb[0].mxu0
  %v1499 = vadd.f32 %v1245, %v1498
  %1500 = vmatprep.mubr.bf16.mxu0 %v1185
  %1501 = vmatmul.mubr.bf16.gmra.mrb[0].mxu0 %v1184
  %v1502 = vpop.f32.mrb[0].mxu0
  %v1503 = vadd.f32 %v1241, %v1502
  %v1504 = vpop.f32.mrb[0].mxu0
  %v1505 = vadd.f32 %v1245, %v1504
  %v1506 = vpop.f32.mrb[0].mxu0
  %v1507 = vadd.f32 %v1241, %v1506
  %v1508 = vpop.f32.mrb[0].mxu0
  %v1509 = vadd.f32 %v1245, %v1508
  %1510 = vmatprep.mubr.bf16.mxu0 %v1187
  %1511 = vmatmul.mubr.bf16.gmra.mrb[0].mxu0 %v1186
  %v1512 = vpop.f32.mrb[0].mxu0
  %v1513 = vadd.f32 %v1241, %v1512
  %v1514 = vpop.f32.mrb[0].mxu0
  %v1515 = vadd.f32 %v1245, %v1514
  %v1516 = vpop.f32.mrb[0].mxu0
  %v1517 = vadd.f32 %v1241, %v1516
  %v1518 = vpop.f32.mrb[0].mxu0
  %v1519 = vadd.f32 %v1245, %v1518
  %1520 = vmatprep.mubr.bf16.mxu0 %v1189
  %1521 = vmatmul.mubr.bf16.gmra.mrb[0].mxu0 %v1188
  %v1522 = vpop.f32.mrb[0].mxu0
  %v1523 = vadd.f32 %v1241, %v1522
  %v1524 = vpop.f32.mrb[0].mxu0
  %v1525 = vadd.f32 %v1245, %v1524
  %v1526 = vpop.f32.mrb[0].mxu0
  %v1527 = vadd.f32 %v1241, %v1526
  %v1528 = vpop.f32.mrb[0].mxu0
  %v1529 = vadd.f32 %v1245, %v1528
  %1530 = vmatprep.mubr.bf16.mxu0 %v1191
  %1531 = vmatmul.mubr.bf16.gmra.mrb[0].mxu0 %v1190
  %v1532 = vpop.f32.mrb[0].mxu0
  %v1533 = vadd.f32 %v1241, %v1532
  %v1534 = vpop.f32.mrb[0].mxu0
  %v1535 = vadd.f32 %v1245, %v1534
  %v1536 = vpop.f32.mrb[0].mxu0
  %v1537 = vadd.f32 %v1241, %v1536
  %v1538 = vpop.f32.mrb[0].mxu0
  %v1539 = vadd.f32 %v1245, %v1538
  %1540 = vmatprep.mubr.bf16.mxu0 %v1193
  %1541 = vmatmul.mubr.bf16.gmra.mrb[0].mxu0 %v1192
  %v1542 = vpop.f32.mrb[0].mxu0
  %v1543 = vadd.f32 %v1241, %v1542
  %v1544 = vpop.f32.mrb[0].mxu0
  %v1545 = vadd.f32 %v1245, %v1544
  %v1546 = vpop.f32.mrb[0].mxu0
  %v1547 = vadd.f32 %v1241, %v1546
  %v1548 = vpop.f32.mrb[0].mxu0
  %v1549 = vadd.f32 %v1245, %v1548
  %1550 = vmatprep.mubr.bf16.mxu0 %v1195
  %1551 = vmatmul.mubr.bf16.gmra.mrb[0].mxu0 %v1194
  %v1552 = vpop.f32.mrb[0].mxu0
  %v1553 = vadd.f32 %v1241, %v1552
  %v1554 = vpop.f32.mrb[0].mxu0
  %v1555 = vadd.f32 %v1245, %v1554
  %v1556 = vpop.f32.mrb[0].mxu0
  %v1557 = vadd.f32 %v1241, %v1556
  %v1558 = vpop.f32.mrb[0].mxu0
  %v1559 = vadd.f32 %v1245, %v1558
  %1560 = vmatprep.mubr.bf16.mxu0 %v1197
  %1561 = vmatmul.mubr.bf16.gmra.mrb[0].mxu0 %v1196
  %v1562 = vpop.f32.mrb[0].mxu0
  %v1563 = vadd.f32 %v1241, %v1562
  %v1564 = vpop.f32.mrb[0].mxu0
  %v1565 = vadd.f32 %v1245, %v1564
  %v1566 = vpop.f32.mrb[0].mxu0
  %v1567 = vadd.f32 %v1241, %v1566
  %v1568 = vpop.f32.mrb[0].mxu0
  %v1569 = vadd.f32 %v1245, %v1568
  %1570 = vmatprep.mubr.bf16.mxu0 %v1199
  %1571 = vmatmul.mubr.bf16.gmra.mrb[0].mxu0 %v1198
  %v1572 = vpop.f32.mrb[0].mxu0
  %v1573 = vadd.f32 %v1241, %v1572
  %v1574 = vpop.f32.mrb[0].mxu0
  %v1575 = vadd.f32 %v1245, %v1574
  %v1576 = vpop.f32.mrb[0].mxu0
  %v1577 = vadd.f32 %v1241, %v1576
  %v1578 = vpop.f32.mrb[0].mxu0
  %v1579 = vadd.f32 %v1245, %v1578
  %1580 = vmatprep.mubr.bf16.mxu0 %v1201
  %1581 = vmatmul.mubr.bf16.gmra.mrb[0].mxu0 %v1200
  %v1582 = vpop.f32.mrb[0].mxu0
  %v1583 = vadd.f32 %v1241, %v1582
  %v1584 = vpop.f32.mrb[0].mxu0
  %v1585 = vadd.f32 %v1245, %v1584
  %v1586 = vpop.f32.mrb[0].mxu0
  %v1587 = vadd.f32 %v1241, %v1586
  %v1588 = vpop.f32.mrb[0].mxu0
  %v1589 = vadd.f32 %v1245, %v1588
  %1590 = vmatprep.mubr.bf16.mxu0 %v1203
  %1591 = vmatmul.mubr.bf16.gmra.mrb[0].mxu0 %v1202
  %v1592 = vpop.f32.mrb[0].mxu0
  %v1593 = vadd.f32 %v1241, %v1592
  %v1594 = vpop.f32.mrb[0].mxu0
  %v1595 = vadd.f32 %v1245, %v1594
  %v1596 = vpop.f32.mrb[0].mxu0
  %v1597 = vadd.f32 %v1241, %v1596
  %v1598 = vpop.f32.mrb[0].mxu0
  %v1599 = vadd.f32 %v1245, %v1598
  %1600 = vdwg.mxu0
  %v1601 = vmax.f32 %v1443, 0.0
  %v1602 = vmax.f32 %v1445, 0.0
  %v1603 = vmax.f32 %v1447, 0.0
  %v1604 = vmax.f32 %v1449, 0.0
  %v1605 = vmax.f32 %v1453, 0.0
  %v1606 = vmax.f32 %v1455, 0.0
  %v1607 = vmax.f32 %v1457, 0.0
  %v1608 = vmax.f32 %v1459, 0.0
  %v1609 = vmax.f32 %v1463, 0.0
  %v1610 = vmax.f32 %v1465, 0.0
  %v1611 = vmax.f32 %v1467, 0.0
  %v1612 = vmax.f32 %v1469, 0.0
  %v1613 = vmax.f32 %v1473, 0.0
  %v1614 = vmax.f32 %v1475, 0.0
  %v1615 = vmax.f32 %v1477, 0.0
  %v1616 = vmax.f32 %v1479, 0.0
  %v1617 = vmax.f32 %v1483, 0.0
  %v1618 = vmax.f32 %v1485, 0.0
  %v1619 = vmax.f32 %v1487, 0.0
  %v1620 = vmax.f32 %v1489, 0.0
  %v1621 = vmax.f32 %v1493, 0.0
  %v1622 = vmax.f32 %v1495, 0.0
  %v1623 = vmax.f32 %v1497, 0.0
  %v1624 = vmax.f32 %v1499, 0.0
  %v1625 = vmax.f32 %v1503, 0.0
  %v1626 = vmax.f32 %v1505, 0.0
  %v1627 = vmax.f32 %v1507, 0.0
  %v1628 = vmax.f32 %v1509, 0.0
  %v1629 = vmax.f32 %v1513, 0.0
  %v1630 = vmax.f32 %v1515, 0.0
  %v1631 = vmax.f32 %v1517, 0.0
  %v1632 = vmax.f32 %v1519, 0.0
  %v1633 = vmax.f32 %v1523, 0.0
  %v1634 = vmax.f32 %v1525, 0.0
  %v1635 = vmax.f32 %v1527, 0.0
  %v1636 = vmax.f32 %v1529, 0.0
  %v1637 = vmax.f32 %v1533, 0.0
  %v1638 = vmax.f32 %v1535, 0.0
  %v1639 = vmax.f32 %v1537, 0.0
  %v1640 = vmax.f32 %v1539, 0.0
  %v1641 = vmax.f32 %v1543, 0.0
  %v1642 = vmax.f32 %v1545, 0.0
  %v1643 = vmax.f32 %v1547, 0.0
  %v1644 = vmax.f32 %v1549, 0.0
  %v1645 = vmax.f32 %v1553, 0.0
  %v1646 = vmax.f32 %v1555, 0.0
  %v1647 = vmax.f32 %v1557, 0.0
  %v1648 = vmax.f32 %v1559, 0.0
  %v1649 = vmax.f32 %v1563, 0.0
  %v1650 = vmax.f32 %v1565, 0.0
  %v1651 = vmax.f32 %v1567, 0.0
  %v1652 = vmax.f32 %v1569, 0.0
  %v1653 = vmax.f32 %v1573, 0.0
  %v1654 = vmax.f32 %v1575, 0.0
  %v1655 = vmax.f32 %v1577, 0.0
  %v1656 = vmax.f32 %v1579, 0.0
  %v1657 = vmax.f32 %v1583, 0.0
  %v1658 = vmax.f32 %v1585, 0.0
  %v1659 = vmax.f32 %v1587, 0.0
  %v1660 = vmax.f32 %v1589, 0.0
  %v1661 = vmax.f32 %v1593, 0.0
  %v1662 = vmax.f32 %v1595, 0.0
  %v1663 = vmax.f32 %v1597, 0.0
  %v1664 = vmax.f32 %v1599, 0.0
  %v1665 = vpack.c.bf16 %v1603, %v1601
  %v1666 = vpack.c.bf16 %v1604, %v1602
  %v1667 = vpack.c.bf16 %v1607, %v1605
  %v1668 = vpack.c.bf16 %v1608, %v1606
  %v1669 = vpack.c.bf16 %v1611, %v1609
  %v1670 = vpack.c.bf16 %v1612, %v1610
  %v1671 = vpack.c.bf16 %v1615, %v1613
  %v1672 = vpack.c.bf16 %v1616, %v1614
  %v1673 = vpack.c.bf16 %v1619, %v1617
  %v1674 = vpack.c.bf16 %v1620, %v1618
  %v1675 = vpack.c.bf16 %v1623, %v1621
  %v1676 = vpack.c.bf16 %v1624, %v1622
  %v1677 = vpack.c.bf16 %v1627, %v1625
  %v1678 = vpack.c.bf16 %v1628, %v1626
  %v1679 = vpack.c.bf16 %v1631, %v1629
  %v1680 = vpack.c.bf16 %v1632, %v1630
  %v1681 = vpack.c.bf16 %v1635, %v1633
  %v1682 = vpack.c.bf16 %v1636, %v1634
  %v1683 = vpack.c.bf16 %v1639, %v1637
  %v1684 = vpack.c.bf16 %v1640, %v1638
  %v1685 = vpack.c.bf16 %v1643, %v1641
  %v1686 = vpack.c.bf16 %v1644, %v1642
  %v1687 = vpack.c.bf16 %v1647, %v1645
  %v1688 = vpack.c.bf16 %v1648, %v1646
  %v1689 = vpack.c.bf16 %v1651, %v1649
  %v1690 = vpack.c.bf16 %v1652, %v1650
  %v1691 = vpack.c.bf16 %v1655, %v1653
  %v1692 = vpack.c.bf16 %v1656, %v1654
  %v1693 = vpack.c.bf16 %v1659, %v1657
  %v1694 = vpack.c.bf16 %v1660, %v1658
  %v1695 = vpack.c.bf16 %v1663, %v1661
  %v1696 = vpack.c.bf16 %v1664, %v1662
  %v1697 = vld [vmem:[%s7] sm:$0xf]
  %v1698 = vld [vmem:[%s7 + $0x4] sm:$0xf]
  %v1699 = vld [vmem:[%s7 + $0x8] sm:$0xf]
  %v1700 = vld [vmem:[%s7 + $0xc] sm:$0xf]
  %v1701 = vld [vmem:[%s7 + $0x10] sm:$0xf]
  %v1702 = vld [vmem:[%s7 + $0x14] sm:$0xf]
  %v1703 = vld [vmem:[%s7 + $0x18] sm:$0xf]
  %v1704 = vld [vmem:[%s7 + $0x1c] sm:$0xf]
  %v1705 = vld [vmem:[%s7 + $0x20] sm:$0xf]
  %v1706 = vld [vmem:[%s7 + $0x24] sm:$0xf]
  %v1707 = vld [vmem:[%s7 + $0x28] sm:$0xf]
  %v1708 = vld [vmem:[%s7 + $0x2c] sm:$0xf]
  %v1709 = vld [vmem:[%s7 + $0x30] sm:$0xf]
  %v1710 = vld [vmem:[%s7 + $0x34] sm:$0xf]
  %v1711 = vld [vmem:[%s7 + $0x38] sm:$0xf]
  %v1712 = vld [vmem:[%s7 + $0x3c] sm:$0xf]
  %v1713 = vld [vmem:[%s7 + $0x40] sm:$0xf]
  %v1714 = vld [vmem:[%s7 + $0x44] sm:$0xf]
  %v1715 = vld [vmem:[%s7 + $0x48] sm:$0xf]
  %v1716 = vld [vmem:[%s7 + $0x4c] sm:$0xf]
  %v1717 = vld [vmem:[%s7 + $0x50] sm:$0xf]
  %v1718 = vld [vmem:[%s7 + $0x54] sm:$0xf]
  %v1719 = vld [vmem:[%s7 + $0x58] sm:$0xf]
  %v1720 = vld [vmem:[%s7 + $0x5c] sm:$0xf]
  %v1721 = vld [vmem:[%s7 + $0x60] sm:$0xf]
  %v1722 = vld [vmem:[%s7 + $0x64] sm:$0xf]
  %v1723 = vld [vmem:[%s7 + $0x68] sm:$0xf]
  %v1724 = vld [vmem:[%s7 + $0x6c] sm:$0xf]
  %v1725 = vld [vmem:[%s7 + $0x70] sm:$0xf]
  %v1726 = vld [vmem:[%s7 + $0x74] sm:$0xf]
  %v1727 = vld [vmem:[%s7 + $0x78] sm:$0xf]
  %v1728 = vld [vmem:[%s7 + $0x7c] sm:$0xf]
  %v1729 = vld [vmem:[%s8] sm:$0x1]
  %v1731 = vlaneseq
  %v1732 = vshrl.u32 %v1731, 7
  %v1733 = vsub.s32 0, %v1732
  %v1734 = vrot.slane %v1729, %v1733
  %v1768 = vunpack.c.l.b16 %v1697
  %v1769 = vunpack.c.l.b16 %v1698
  %v1770 = vunpack.c.l.b16 %v1699
  %v1771 = vunpack.c.l.b16 %v1700
  %v1772 = vunpack.c.l.b16 %v1701
  %v1773 = vunpack.c.l.b16 %v1702
  %v1774 = vunpack.c.l.b16 %v1703
  %v1775 = vunpack.c.l.b16 %v1704
  %v1776 = vunpack.c.l.b16 %v1705
  %v1777 = vunpack.c.l.b16 %v1706
  %v1778 = vunpack.c.l.b16 %v1707
  %v1779 = vunpack.c.l.b16 %v1708
  %v1780 = vunpack.c.l.b16 %v1709
  %v1781 = vunpack.c.l.b16 %v1710
  %v1782 = vunpack.c.l.b16 %v1711
  %v1783 = vunpack.c.l.b16 %v1712
  %v1784 = vunpack.c.l.b16 %v1713
  %v1785 = vunpack.c.l.b16 %v1714
  %v1786 = vunpack.c.l.b16 %v1715
  %v1787 = vunpack.c.l.b16 %v1716
  %v1788 = vunpack.c.l.b16 %v1717
  %v1789 = vunpack.c.l.b16 %v1718
  %v1790 = vunpack.c.l.b16 %v1719
  %v1791 = vunpack.c.l.b16 %v1720
  %v1792 = vunpack.c.l.b16 %v1721
  %v1793 = vunpack.c.l.b16 %v1722
  %v1794 = vunpack.c.l.b16 %v1723
  %v1795 = vunpack.c.l.b16 %v1724
  %v1796 = vunpack.c.l.b16 %v1725
  %v1797 = vunpack.c.l.b16 %v1726
  %v1798 = vunpack.c.l.b16 %v1727
  %v1799 = vunpack.c.l.b16 %v1728
  %v1800 = vpack.c.b16 %v1769, %v1768
  %v1801 = vpack.c.b16 %v1771, %v1770
  %v1802 = vpack.c.b16 %v1773, %v1772
  %v1803 = vpack.c.b16 %v1775, %v1774
  %v1804 = vpack.c.b16 %v1777, %v1776
  %v1805 = vpack.c.b16 %v1779, %v1778
  %v1806 = vpack.c.b16 %v1781, %v1780
  %v1807 = vpack.c.b16 %v1783, %v1782
  %v1808 = vpack.c.b16 %v1785, %v1784
  %v1809 = vpack.c.b16 %v1787, %v1786
  %v1810 = vpack.c.b16 %v1789, %v1788
  %v1811 = vpack.c.b16 %v1791, %v1790
  %v1812 = vpack.c.b16 %v1793, %v1792
  %v1813 = vpack.c.b16 %v1795, %v1794
  %v1814 = vpack.c.b16 %v1797, %v1796
  %v1815 = vpack.c.b16 %v1799, %v1798
  %1832 = vmatprep.subr.bf16.mxu0 0
  %1833 = vmatpush1.bf16.msra.mxu0 %v1800
  %1834 = vmatprep.subr.bf16.mxu0 0
  %1835 = vmatpush1.bf16.msra.mxu0 %v1801
  %1836 = vmatprep.subr.bf16.mxu0 0
  %1837 = vmatpush1.bf16.msra.mxu0 %v1802
  %1838 = vmatprep.subr.bf16.mxu0 0
  %1839 = vmatpush1.bf16.msra.mxu0 %v1803
  %1840 = vmatprep.subr.bf16.mxu0 0
  %1841 = vmatpush1.bf16.msra.mxu0 %v1804
  %1842 = vmatprep.subr.bf16.mxu0 0
  %1843 = vmatpush1.bf16.msra.mxu0 %v1805
  %1844 = vmatprep.subr.bf16.mxu0 0
  %1845 = vmatpush1.bf16.msra.mxu0 %v1806
  %1846 = vmatprep.subr.bf16.mxu0 0
  %1847 = vmatpush1.bf16.msra.mxu0 %v1807
  %1848 = vmatprep.subr.bf16.mxu0 0
  %1849 = vmatpush1.bf16.msra.mxu0 %v1808
  %1850 = vmatprep.subr.bf16.mxu0 0
  %1851 = vmatpush1.bf16.msra.mxu0 %v1809
  %1852 = vmatprep.subr.bf16.mxu0 0
  %1853 = vmatpush1.bf16.msra.mxu0 %v1810
  %1854 = vmatprep.subr.bf16.mxu0 0
  %1855 = vmatpush1.bf16.msra.mxu0 %v1811
  %1856 = vmatprep.subr.bf16.mxu0 0
  %1857 = vmatpush1.bf16.msra.mxu0 %v1812
  %1858 = vmatprep.subr.bf16.mxu0 0
  %1859 = vmatpush1.bf16.msra.mxu0 %v1813
  %1860 = vmatprep.subr.bf16.mxu0 0
  %1861 = vmatpush1.bf16.msra.mxu0 %v1814
  %1862 = vmatprep.subr.bf16.mxu0 0
  %1863 = vmatpush1.bf16.msra.mxu0 %v1815
  %1864 = vmatprep.mubr.bf16.mxu0 %v1666
  %1865 = vmatmul.mubr.bf16.gmra.mrb[0].mxu0 %v1665
  %v1866 = vpop.f32.mrb[0].mxu0
  %v1867 = vadd.f32 %v1734, %v1866
  %v1868 = vpop.f32.mrb[0].mxu0
  %v1869 = vpop.f32.mrb[0].mxu0
  %v1870 = vadd.f32 %v1734, %v1869
  %v1871 = vpop.f32.mrb[0].mxu0
  %1872 = vmatprep.mubr.bf16.mxu0 %v1668
  %1873 = vmatmul.mubr.bf16.gmra.mrb[0].mxu0 %v1667
  %v1874 = vpop.f32.mrb[0].mxu0
  %v1875 = vadd.f32 %v1734, %v1874
  %v1876 = vpop.f32.mrb[0].mxu0
  %v1877 = vpop.f32.mrb[0].mxu0
  %v1878 = vadd.f32 %v1734, %v1877
  %v1879 = vpop.f32.mrb[0].mxu0
  %1880 = vmatprep.mubr.bf16.mxu0 %v1670
  %1881 = vmatmul.mubr.bf16.gmra.mrb[0].mxu0 %v1669
  %v1882 = vpop.f32.mrb[0].mxu0
  %v1883 = vadd.f32 %v1734, %v1882
  %v1884 = vpop.f32.mrb[0].mxu0
  %v1885 = vpop.f32.mrb[0].mxu0
  %v1886 = vadd.f32 %v1734, %v1885
  %v1887 = vpop.f32.mrb[0].mxu0
  %1888 = vmatprep.mubr.bf16.mxu0 %v1672
  %1889 = vmatmul.mubr.bf16.gmra.mrb[0].mxu0 %v1671
  %v1890 = vpop.f32.mrb[0].mxu0
  %v1891 = vadd.f32 %v1734, %v1890
  %v1892 = vpop.f32.mrb[0].mxu0
  %v1893 = vpop.f32.mrb[0].mxu0
  %v1894 = vadd.f32 %v1734, %v1893
  %v1895 = vpop.f32.mrb[0].mxu0
  %1896 = vmatprep.mubr.bf16.mxu0 %v1674
  %1897 = vmatmul.mubr.bf16.gmra.mrb[0].mxu0 %v1673
  %v1898 = vpop.f32.mrb[0].mxu0
  %v1899 = vadd.f32 %v1734, %v1898
  %v1900 = vpop.f32.mrb[0].mxu0
  %v1901 = vpop.f32.mrb[0].mxu0
  %v1902 = vadd.f32 %v1734, %v1901
  %v1903 = vpop.f32.mrb[0].mxu0
  %1904 = vmatprep.mubr.bf16.mxu0 %v1676
  %1905 = vmatmul.mubr.bf16.gmra.mrb[0].mxu0 %v1675
  %v1906 = vpop.f32.mrb[0].mxu0
  %v1907 = vadd.f32 %v1734, %v1906
  %v1908 = vpop.f32.mrb[0].mxu0
  %v1909 = vpop.f32.mrb[0].mxu0
  %v1910 = vadd.f32 %v1734, %v1909
  %v1911 = vpop.f32.mrb[0].mxu0
  %1912 = vmatprep.mubr.bf16.mxu0 %v1678
  %1913 = vmatmul.mubr.bf16.gmra.mrb[0].mxu0 %v1677
  %v1914 = vpop.f32.mrb[0].mxu0
  %v1915 = vadd.f32 %v1734, %v1914
  %v1916 = vpop.f32.mrb[0].mxu0
  %v1917 = vpop.f32.mrb[0].mxu0
  %v1918 = vadd.f32 %v1734, %v1917
  %v1919 = vpop.f32.mrb[0].mxu0
  %1920 = vmatprep.mubr.bf16.mxu0 %v1680
  %1921 = vmatmul.mubr.bf16.gmra.mrb[0].mxu0 %v1679
  %v1922 = vpop.f32.mrb[0].mxu0
  %v1923 = vadd.f32 %v1734, %v1922
  %v1924 = vpop.f32.mrb[0].mxu0
  %v1925 = vpop.f32.mrb[0].mxu0
  %v1926 = vadd.f32 %v1734, %v1925
  %v1927 = vpop.f32.mrb[0].mxu0
  %1928 = vmatprep.mubr.bf16.mxu0 %v1682
  %1929 = vmatmul.mubr.bf16.gmra.mrb[0].mxu0 %v1681
  %v1930 = vpop.f32.mrb[0].mxu0
  %v1931 = vadd.f32 %v1734, %v1930
  %v1932 = vpop.f32.mrb[0].mxu0
  %v1933 = vpop.f32.mrb[0].mxu0
  %v1934 = vadd.f32 %v1734, %v1933
  %v1935 = vpop.f32.mrb[0].mxu0
  %1936 = vmatprep.mubr.bf16.mxu0 %v1684
  %1937 = vmatmul.mubr.bf16.gmra.mrb[0].mxu0 %v1683
  %v1938 = vpop.f32.mrb[0].mxu0
  %v1939 = vadd.f32 %v1734, %v1938
  %v1940 = vpop.f32.mrb[0].mxu0
  %v1941 = vpop.f32.mrb[0].mxu0
  %v1942 = vadd.f32 %v1734, %v1941
  %v1943 = vpop.f32.mrb[0].mxu0
  %1944 = vmatprep.mubr.bf16.mxu0 %v1686
  %1945 = vmatmul.mubr.bf16.gmra.mrb[0].mxu0 %v1685
  %v1946 = vpop.f32.mrb[0].mxu0
  %v1947 = vadd.f32 %v1734, %v1946
  %v1948 = vpop.f32.mrb[0].mxu0
  %v1949 = vpop.f32.mrb[0].mxu0
  %v1950 = vadd.f32 %v1734, %v1949
  %v1951 = vpop.f32.mrb[0].mxu0
  %1952 = vmatprep.mubr.bf16.mxu0 %v1688
  %1953 = vmatmul.mubr.bf16.gmra.mrb[0].mxu0 %v1687
  %v1954 = vpop.f32.mrb[0].mxu0
  %v1955 = vadd.f32 %v1734, %v1954
  %v1956 = vpop.f32.mrb[0].mxu0
  %v1957 = vpop.f32.mrb[0].mxu0
  %v1958 = vadd.f32 %v1734, %v1957
  %v1959 = vpop.f32.mrb[0].mxu0
  %1960 = vmatprep.mubr.bf16.mxu0 %v1690
  %1961 = vmatmul.mubr.bf16.gmra.mrb[0].mxu0 %v1689
  %v1962 = vpop.f32.mrb[0].mxu0
  %v1963 = vadd.f32 %v1734, %v1962
  %v1964 = vpop.f32.mrb[0].mxu0
  %v1965 = vpop.f32.mrb[0].mxu0
  %v1966 = vadd.f32 %v1734, %v1965
  %v1967 = vpop.f32.mrb[0].mxu0
  %1968 = vmatprep.mubr.bf16.mxu0 %v1692
  %1969 = vmatmul.mubr.bf16.gmra.mrb[0].mxu0 %v1691
  %v1970 = vpop.f32.mrb[0].mxu0
  %v1971 = vadd.f32 %v1734, %v1970
  %v1972 = vpop.f32.mrb[0].mxu0
  %v1973 = vpop.f32.mrb[0].mxu0
  %v1974 = vadd.f32 %v1734, %v1973
  %v1975 = vpop.f32.mrb[0].mxu0
  %1976 = vmatprep.mubr.bf16.mxu0 %v1694
  %1977 = vmatmul.mubr.bf16.gmra.mrb[0].mxu0 %v1693
  %v1978 = vpop.f32.mrb[0].mxu0
  %v1979 = vadd.f32 %v1734, %v1978
  %v1980 = vpop.f32.mrb[0].mxu0
  %v1981 = vpop.f32.mrb[0].mxu0
  %v1982 = vadd.f32 %v1734, %v1981
  %v1983 = vpop.f32.mrb[0].mxu0
  %1984 = vmatprep.mubr.bf16.mxu0 %v1696
  %1985 = vmatmul.mubr.bf16.gmra.mrb[0].mxu0 %v1695
  %v1986 = vpop.f32.mrb[0].mxu0
  %v1987 = vadd.f32 %v1734, %v1986
  %v1988 = vpop.f32.mrb[0].mxu0
  %v1989 = vpop.f32.mrb[0].mxu0
  %v1990 = vadd.f32 %v1734, %v1989
  %v1991 = vpop.f32.mrb[0].mxu0
  %1992 = vdwg.mxu0
  %v1993 = vxor.u32 %v1867, 2147483648
  %v1994 = vxor.u32 %v1870, 2147483648
  %v1995 = vxor.u32 %v1875, 2147483648
  %v1996 = vxor.u32 %v1878, 2147483648
  %v1997 = vxor.u32 %v1883, 2147483648
  %v1998 = vxor.u32 %v1886, 2147483648
  %v1999 = vxor.u32 %v1891, 2147483648
  %v2000 = vxor.u32 %v1894, 2147483648
  %v2001 = vxor.u32 %v1899, 2147483648
  %v2002 = vxor.u32 %v1902, 2147483648
  %v2003 = vxor.u32 %v1907, 2147483648
  %v2004 = vxor.u32 %v1910, 2147483648
  %v2005 = vxor.u32 %v1915, 2147483648
  %v2006 = vxor.u32 %v1918, 2147483648
  %v2007 = vxor.u32 %v1923, 2147483648
  %v2008 = vxor.u32 %v1926, 2147483648
  %v2009 = vxor.u32 %v1931, 2147483648
  %v2010 = vxor.u32 %v1934, 2147483648
  %v2011 = vxor.u32 %v1939, 2147483648
  %v2012 = vxor.u32 %v1942, 2147483648
  %v2013 = vxor.u32 %v1947, 2147483648
  %v2014 = vxor.u32 %v1950, 2147483648
  %v2015 = vxor.u32 %v1955, 2147483648
  %v2016 = vxor.u32 %v1958, 2147483648
  %v2017 = vxor.u32 %v1963, 2147483648
  %v2018 = vxor.u32 %v1966, 2147483648
  %v2019 = vxor.u32 %v1971, 2147483648
  %v2020 = vxor.u32 %v1974, 2147483648
  %v2021 = vxor.u32 %v1979, 2147483648
  %v2022 = vxor.u32 %v1982, 2147483648
  %v2023 = vxor.u32 %v1987, 2147483648
  %v2024 = vxor.u32 %v1990, 2147483648
  %v2025 = vmul.f32 %v1993, 1.442695
  %v2026 = vpow.pop %v2025
  %v2027 = vmul.f32 %v1994, 1.442695
  %v2028 = vpow.pop %v2027
  %v2029 = vmul.f32 %v1995, 1.442695
  %v2030 = vpow.pop %v2029
  %v2031 = vmul.f32 %v1996, 1.442695
  %v2032 = vpow.pop %v2031
  %v2033 = vmul.f32 %v1997, 1.442695
  %v2034 = vpow.pop %v2033
  %v2035 = vmul.f32 %v1998, 1.442695
  %v2036 = vpow.pop %v2035
  %v2037 = vmul.f32 %v1999, 1.442695
  %v2038 = vpow.pop %v2037
  %v2039 = vmul.f32 %v2000, 1.442695
  %v2040 = vpow.pop %v2039
  %v2041 = vmul.f32 %v2001, 1.442695
  %v2042 = vpow.pop %v2041
  %v2043 = vmul.f32 %v2002, 1.442695
  %v2044 = vpow.pop %v2043
  %v2045 = vmul.f32 %v2003, 1.442695
  %v2046 = vpow.pop %v2045
  %v2047 = vmul.f32 %v2004, 1.442695
  %v2048 = vpow.pop %v2047
  %v2049 = vmul.f32 %v2005, 1.442695
  %v2050 = vpow.pop %v2049
  %v2051 = vmul.f32 %v2006, 1.442695
  %v2052 = vpow.pop %v2051
  %v2053 = vmul.f32 %v2007, 1.442695
  %v2054 = vpow.pop %v2053
  %v2055 = vmul.f32 %v2008, 1.442695
  %v2056 = vpow.pop %v2055
  %v2057 = vmul.f32 %v2009, 1.442695
  %v2058 = vpow.pop %v2057
  %v2059 = vmul.f32 %v2010, 1.442695
  %v2060 = vpow.pop %v2059
  %v2061 = vmul.f32 %v2011, 1.442695
  %v2062 = vpow.pop %v2061
  %v2063 = vmul.f32 %v2012, 1.442695
  %v2064 = vpow.pop %v2063
  %v2065 = vmul.f32 %v2013, 1.442695
  %v2066 = vpow.pop %v2065
  %v2067 = vmul.f32 %v2014, 1.442695
  %v2068 = vpow.pop %v2067
  %v2069 = vmul.f32 %v2015, 1.442695
  %v2070 = vpow.pop %v2069
  %v2071 = vmul.f32 %v2016, 1.442695
  %v2072 = vpow.pop %v2071
  %v2073 = vmul.f32 %v2017, 1.442695
  %v2074 = vpow.pop %v2073
  %v2075 = vmul.f32 %v2018, 1.442695
  %v2076 = vpow.pop %v2075
  %v2077 = vmul.f32 %v2019, 1.442695
  %v2078 = vpow.pop %v2077
  %v2079 = vmul.f32 %v2020, 1.442695
  %v2080 = vpow.pop %v2079
  %v2081 = vmul.f32 %v2021, 1.442695
  %v2082 = vpow.pop %v2081
  %v2083 = vmul.f32 %v2022, 1.442695
  %v2084 = vpow.pop %v2083
  %v2085 = vmul.f32 %v2023, 1.442695
  %v2086 = vpow.pop %v2085
  %v2087 = vmul.f32 %v2024, 1.442695
  %v2088 = vpow.pop %v2087
  %v2089 = vadd.f32 %v2026, 1.0
  %v2090 = vadd.f32 %v2028, 1.0
  %v2091 = vadd.f32 %v2030, 1.0
  %v2092 = vadd.f32 %v2032, 1.0
  %v2093 = vadd.f32 %v2034, 1.0
  %v2094 = vadd.f32 %v2036, 1.0
  %v2095 = vadd.f32 %v2038, 1.0
  %v2096 = vadd.f32 %v2040, 1.0
  %v2097 = vadd.f32 %v2042, 1.0
  %v2098 = vadd.f32 %v2044, 1.0
  %v2099 = vadd.f32 %v2046, 1.0
  %v2100 = vadd.f32 %v2048, 1.0
  %v2101 = vadd.f32 %v2050, 1.0
  %v2102 = vadd.f32 %v2052, 1.0
  %v2103 = vadd.f32 %v2054, 1.0
  %v2104 = vadd.f32 %v2056, 1.0
  %v2105 = vadd.f32 %v2058, 1.0
  %v2106 = vadd.f32 %v2060, 1.0
  %v2107 = vadd.f32 %v2062, 1.0
  %v2108 = vadd.f32 %v2064, 1.0
  %v2109 = vadd.f32 %v2066, 1.0
  %v2110 = vadd.f32 %v2068, 1.0
  %v2111 = vadd.f32 %v2070, 1.0
  %v2112 = vadd.f32 %v2072, 1.0
  %v2113 = vadd.f32 %v2074, 1.0
  %v2114 = vadd.f32 %v2076, 1.0
  %v2115 = vadd.f32 %v2078, 1.0
  %v2116 = vadd.f32 %v2080, 1.0
  %v2117 = vadd.f32 %v2082, 1.0
  %v2118 = vadd.f32 %v2084, 1.0
  %v2119 = vadd.f32 %v2086, 1.0
  %v2120 = vadd.f32 %v2088, 1.0
  %v2121 = vrcp.pop %v2089
  %v2122 = vmul.f32 1.0, %v2121
  %v2123 = vrcp.pop %v2090
  %v2124 = vmul.f32 1.0, %v2123
  %v2125 = vrcp.pop %v2091
  %v2126 = vmul.f32 1.0, %v2125
  %v2127 = vrcp.pop %v2092
  %v2128 = vmul.f32 1.0, %v2127
  %v2129 = vrcp.pop %v2093
  %v2130 = vmul.f32 1.0, %v2129
  %v2131 = vrcp.pop %v2094
  %v2132 = vmul.f32 1.0, %v2131
  %v2133 = vrcp.pop %v2095
  %v2134 = vmul.f32 1.0, %v2133
  %v2135 = vrcp.pop %v2096
  %v2136 = vmul.f32 1.0, %v2135
  %v2137 = vrcp.pop %v2097
  %v2138 = vmul.f32 1.0, %v2137
  %v2139 = vrcp.pop %v2098
  %v2140 = vmul.f32 1.0, %v2139
  %v2141 = vrcp.pop %v2099
  %v2142 = vmul.f32 1.0, %v2141
  %v2143 = vrcp.pop %v2100
  %v2144 = vmul.f32 1.0, %v2143
  %v2145 = vrcp.pop %v2101
  %v2146 = vmul.f32 1.0, %v2145
  %v2147 = vrcp.pop %v2102
  %v2148 = vmul.f32 1.0, %v2147
  %v2149 = vrcp.pop %v2103
  %v2150 = vmul.f32 1.0, %v2149
  %v2151 = vrcp.pop %v2104
  %v2152 = vmul.f32 1.0, %v2151
  %v2153 = vrcp.pop %v2105
  %v2154 = vmul.f32 1.0, %v2153
  %v2155 = vrcp.pop %v2106
  %v2156 = vmul.f32 1.0, %v2155
  %v2157 = vrcp.pop %v2107
  %v2158 = vmul.f32 1.0, %v2157
  %v2159 = vrcp.pop %v2108
  %v2160 = vmul.f32 1.0, %v2159
  %v2161 = vrcp.pop %v2109
  %v2162 = vmul.f32 1.0, %v2161
  %v2163 = vrcp.pop %v2110
  %v2164 = vmul.f32 1.0, %v2163
  %v2165 = vrcp.pop %v2111
  %v2166 = vmul.f32 1.0, %v2165
  %v2167 = vrcp.pop %v2112
  %v2168 = vmul.f32 1.0, %v2167
  %v2169 = vrcp.pop %v2113
  %v2170 = vmul.f32 1.0, %v2169
  %v2171 = vrcp.pop %v2114
  %v2172 = vmul.f32 1.0, %v2171
  %v2173 = vrcp.pop %v2115
  %v2174 = vmul.f32 1.0, %v2173
  %v2175 = vrcp.pop %v2116
  %v2176 = vmul.f32 1.0, %v2175
  %v2177 = vrcp.pop %v2117
  %v2178 = vmul.f32 1.0, %v2177
  %v2179 = vrcp.pop %v2118
  %v2180 = vmul.f32 1.0, %v2179
  %v2181 = vrcp.pop %v2119
  %v2182 = vmul.f32 1.0, %v2181
  %v2183 = vrcp.pop %v2120
  %v2184 = vmul.f32 1.0, %v2183
  %v2185 = vpack.c.bf16 %v2124, %v2122
  %v2186 = vpack.c.bf16 %v2128, %v2126
  %v2187 = vpack.c.bf16 %v2132, %v2130
  %v2188 = vpack.c.bf16 %v2136, %v2134
  %v2189 = vpack.c.bf16 %v2140, %v2138
  %v2190 = vpack.c.bf16 %v2144, %v2142
  %v2191 = vpack.c.bf16 %v2148, %v2146
  %v2192 = vpack.c.bf16 %v2152, %v2150
  %v2193 = vpack.c.bf16 %v2156, %v2154
  %v2194 = vpack.c.bf16 %v2160, %v2158
  %v2195 = vpack.c.bf16 %v2164, %v2162
  %v2196 = vpack.c.bf16 %v2168, %v2166
  %v2197 = vpack.c.bf16 %v2172, %v2170
  %v2198 = vpack.c.bf16 %v2176, %v2174
  %v2199 = vpack.c.bf16 %v2180, %v2178
  %v2200 = vpack.c.bf16 %v2184, %v2182
  %v2217 = vunpack.c.l.b16 %v2185
  %v2218 = vunpack.c.h.b16 %v2185
  %v2219 = vunpack.c.l.b16 %v2186
  %v2220 = vunpack.c.h.b16 %v2186
  %v2221 = vunpack.c.l.b16 %v2187
  %v2222 = vunpack.c.h.b16 %v2187
  %v2223 = vunpack.c.l.b16 %v2188
  %v2224 = vunpack.c.h.b16 %v2188
  %v2225 = vunpack.c.l.b16 %v2189
  %v2226 = vunpack.c.h.b16 %v2189
  %v2227 = vunpack.c.l.b16 %v2190
  %v2228 = vunpack.c.h.b16 %v2190
  %v2229 = vunpack.c.l.b16 %v2191
  %v2230 = vunpack.c.h.b16 %v2191
  %v2231 = vunpack.c.l.b16 %v2192
  %v2232 = vunpack.c.h.b16 %v2192
  %v2233 = vunpack.c.l.b16 %v2193
  %v2234 = vunpack.c.h.b16 %v2193
  %v2235 = vunpack.c.l.b16 %v2194
  %v2236 = vunpack.c.h.b16 %v2194
  %v2237 = vunpack.c.l.b16 %v2195
  %v2238 = vunpack.c.h.b16 %v2195
  %v2239 = vunpack.c.l.b16 %v2196
  %v2240 = vunpack.c.h.b16 %v2196
  %v2241 = vunpack.c.l.b16 %v2197
  %v2242 = vunpack.c.h.b16 %v2197
  %v2243 = vunpack.c.l.b16 %v2198
  %v2244 = vunpack.c.h.b16 %v2198
  %v2245 = vunpack.c.l.b16 %v2199
  %v2246 = vunpack.c.h.b16 %v2199
  %v2247 = vunpack.c.l.b16 %v2200
  %v2248 = vunpack.c.h.b16 %v2200
  %v2249 = vpack.c.b16 %v2217, %v2217
  %v2250 = vpack.c.b16 %v2218, %v2218
  %v2251 = vpack.c.b16 %v2219, %v2219
  %v2252 = vpack.c.b16 %v2220, %v2220
  %v2253 = vpack.c.b16 %v2221, %v2221
  %v2254 = vpack.c.b16 %v2222, %v2222
  %v2255 = vpack.c.b16 %v2223, %v2223
  %v2256 = vpack.c.b16 %v2224, %v2224
  %v2257 = vpack.c.b16 %v2225, %v2225
  %v2258 = vpack.c.b16 %v2226, %v2226
  %v2259 = vpack.c.b16 %v2227, %v2227
  %v2260 = vpack.c.b16 %v2228, %v2228
  %v2261 = vpack.c.b16 %v2229, %v2229
  %v2262 = vpack.c.b16 %v2230, %v2230
  %v2263 = vpack.c.b16 %v2231, %v2231
  %v2264 = vpack.c.b16 %v2232, %v2232
  %v2265 = vpack.c.b16 %v2233, %v2233
  %v2266 = vpack.c.b16 %v2234, %v2234
  %v2267 = vpack.c.b16 %v2235, %v2235
  %v2268 = vpack.c.b16 %v2236, %v2236
  %v2269 = vpack.c.b16 %v2237, %v2237
  %v2270 = vpack.c.b16 %v2238, %v2238
  %v2271 = vpack.c.b16 %v2239, %v2239
  %v2272 = vpack.c.b16 %v2240, %v2240
  %v2273 = vpack.c.b16 %v2241, %v2241
  %v2274 = vpack.c.b16 %v2242, %v2242
  %v2275 = vpack.c.b16 %v2243, %v2243
  %v2276 = vpack.c.b16 %v2244, %v2244
  %v2277 = vpack.c.b16 %v2245, %v2245
  %v2278 = vpack.c.b16 %v2246, %v2246
  %v2279 = vpack.c.b16 %v2247, %v2247
  %v2280 = vpack.c.b16 %v2248, %v2248
  %2313 = vst [vmem:[%s9] sm:$0xf] %v2249
  %2314 = vst [vmem:[%s9 + $0x4] sm:$0xf] %v2250
  %2315 = vst [vmem:[%s9 + $0x8] sm:$0xf] %v2251
  %2316 = vst [vmem:[%s9 + $0xc] sm:$0xf] %v2252
  %2317 = vst [vmem:[%s9 + $0x10] sm:$0xf] %v2253
  %2318 = vst [vmem:[%s9 + $0x14] sm:$0xf] %v2254
  %2319 = vst [vmem:[%s9 + $0x18] sm:$0xf] %v2255
  %2320 = vst [vmem:[%s9 + $0x1c] sm:$0xf] %v2256
  %2321 = vst [vmem:[%s9 + $0x20] sm:$0xf] %v2257
  %2322 = vst [vmem:[%s9 + $0x24] sm:$0xf] %v2258
  %2323 = vst [vmem:[%s9 + $0x28] sm:$0xf] %v2259
  %2324 = vst [vmem:[%s9 + $0x2c] sm:$0xf] %v2260
  %2325 = vst [vmem:[%s9 + $0x30] sm:$0xf] %v2261
  %2326 = vst [vmem:[%s9 + $0x34] sm:$0xf] %v2262
  %2327 = vst [vmem:[%s9 + $0x38] sm:$0xf] %v2263
  %2328 = vst [vmem:[%s9 + $0x3c] sm:$0xf] %v2264
  %2329 = vst [vmem:[%s9 + $0x40] sm:$0xf] %v2265
  %2330 = vst [vmem:[%s9 + $0x44] sm:$0xf] %v2266
  %2331 = vst [vmem:[%s9 + $0x48] sm:$0xf] %v2267
  %2332 = vst [vmem:[%s9 + $0x4c] sm:$0xf] %v2268
  %2333 = vst [vmem:[%s9 + $0x50] sm:$0xf] %v2269
  %2334 = vst [vmem:[%s9 + $0x54] sm:$0xf] %v2270
  %2335 = vst [vmem:[%s9 + $0x58] sm:$0xf] %v2271
  %2336 = vst [vmem:[%s9 + $0x5c] sm:$0xf] %v2272
  %2337 = vst [vmem:[%s9 + $0x60] sm:$0xf] %v2273
  %2338 = vst [vmem:[%s9 + $0x64] sm:$0xf] %v2274
  %2339 = vst [vmem:[%s9 + $0x68] sm:$0xf] %v2275
  %2340 = vst [vmem:[%s9 + $0x6c] sm:$0xf] %v2276
  %2341 = vst [vmem:[%s9 + $0x70] sm:$0xf] %v2277
  %2342 = vst [vmem:[%s9 + $0x74] sm:$0xf] %v2278
  %2343 = vst [vmem:[%s9 + $0x78] sm:$0xf] %v2279
  %2344 = vst [vmem:[%s9 + $0x7c] sm:$0xf] %v2280
  // Predicated region
  $region38: #{actor_forward.1} parent=0 // pred_check
    _
  $region39: #{actor_forward.1} parent=0 // pred_check_branch
    %2346 = sbr.rel (0) target = $region41
  $region40: #{actor_forward.1} parent=0 // pred_region
    _
  $region41: #{actor_forward.1} parent=0 // pred_fallthru
    _
  // Predicated region
  $region42: #{actor_forward.1} parent=0 // pred_check
    _
  $region43: #{actor_forward.1} parent=0 // pred_check_branch
    %2348 = sbr.rel (0) target = $region45
  $region44: #{actor_forward.1} parent=0 // pred_region
    _
  $region45: #{actor_forward.1} parent=0 // pred_fallthru
    _

</llo_original>
